<compile_context>
chip_gen: v5e
topology: v5e:2x2
jax: 0.10.0
libtpu: 0.0.40
codegen_flags: <defaults>
</compile_context>

<pallas_src>
import functools

import jax
import jax.numpy as jnp
from jax.experimental import pallas as pl
from jax.experimental.pallas import tpu as pltpu


# ----------------------------------------------------------------------------
# VMEM budgeting helpers (generation aware)
# ----------------------------------------------------------------------------
def _vmem_capacity_bytes():
    try:
        info = pltpu.get_tpu_info()
        cap = getattr(info, "vmem_capacity_bytes", None)
        if cap:
            return int(cap)
    except Exception:
        pass
    return 128 * 1024 * 1024  # v5e / v6e default


def _est_vmem_bytes(tr, w, cin, c2, skip_bytes):
    trx = tr // 2
    x_b = 2 * (trx + 2) * w * cin * 4                # x block + halos, dbl-buffered
    skip_b = 2 * (tr + 2) * w * c2 * skip_bytes      # skip block + halos, dbl-buffered
    out_b = 2 * tr * w * c2 * 4                      # output block, dbl-buffered
    zbuf_b = (tr + 2) * (w + 2) * c2 * 2             # bf16 scratch
    temps = (tr + 2) * w * c2 * 16                   # in-kernel temporaries (taps, acc)
    return x_b + skip_b + out_b + zbuf_b + temps + (1 << 20)


def _pick_row_tile(h2, n_batch, w, cin, c2, skip_bytes, budget, row_tile=None):
    cands = sorted((d for d in range(2, h2 + 1, 2) if h2 % d == 0), reverse=True)
    if row_tile is not None:
        for d in cands:
            if d <= row_tile:
                return d
        return 2
    fits = [d for d in cands if _est_vmem_bytes(d, w, cin, c2, skip_bytes) <= budget]
    if not fits:
        return 2
    # Prefer >= 2 grid steps when batch == 1 so both TensorCores get work.
    if n_batch == 1 and h2 // fits[0] < 2 and len(fits) > 1:
        return fits[1]
    return fits[0]


# ----------------------------------------------------------------------------
# Fused kernel
# ----------------------------------------------------------------------------
def _us_block_kernel(x_c, x_u, x_d, s_e, s_o, s_u, s_d,
                     wte, wto, bt2, wcc, w0s, w2s, bc2,
                     o_ref, zbuf, *, TR, W, C):
    f32 = jnp.float32
    bf16 = jnp.bfloat16
    C2 = 2 * C
    TRX = TR // 2
    M = TR * W
    r = pl.program_id(1)
    nrb = pl.num_programs(1)
    cin = x_c.shape[-1]

    # ---- zero the left / right width-halo column pairs (image border padding) ----
    zcol = jnp.zeros((TRX + 1, 2, C2), bf16)
    zbuf[:, :, 0, :] = zcol
    zbuf[:, :, W + 1, :] = zcol

    # ---- ConvTranspose2d(k=2, s=2) + bias + skip-add, bulk per row parity ----
    bt = bt2[...]                                            # (1, 2C) f32
    xc = x_c[...].reshape(TRX * W, cin).astype(bf16)
    y_e = jnp.dot(xc, wte[...], preferred_element_type=f32)  # even z rows (a = 0)
    y_o = jnp.dot(xc, wto[...], preferred_element_type=f32)  # odd  z rows (a = 1)
    z_e = (y_e + bt).reshape(TRX, W, C2) + s_e[...].astype(f32)
    z_o = (y_o + bt).reshape(TRX, W, C2) + s_o[...].astype(f32)
    # zbuf views the zero-padded, row-interleaved z image as
    # (row-pair, parity, W+2, 2C):  interleaved row g (0..TR+1) <-> zbuf[g//2, g%2]
    zbuf[0:TRX, 1, 1:W + 1, :] = z_e.astype(bf16)            # block even rows -> g = 2k+1
    zbuf[1:TRX + 1, 0, 1:W + 1, :] = z_o.astype(bf16)        # block odd rows  -> g = 2k+2

    # ---- single-row vertical halos (zeroed at the image border) ----
    y_t = jnp.dot(x_u[...].astype(bf16), wto[...], preferred_element_type=f32)
    z_t = y_t + bt + s_u[...].astype(f32)
    zbuf[0, 0, 1:W + 1, :] = jnp.where(r > 0, z_t, 0.0).astype(bf16)
    y_b = jnp.dot(x_d[...].astype(bf16), wte[...], preferred_element_type=f32)
    z_b = y_b + bt + s_d[...].astype(f32)
    zbuf[TRX, 1, 1:W + 1, :] = jnp.where(r < nrb - 1, z_b, 0.0).astype(bf16)

    # ---- 3x3 conv over the paired-lane layout ----
    # Column-shifted taps materialised once (3 loads instead of 9).
    sm = zbuf[:, :, 0:W, :].reshape((TR + 2) * W, C2)        # column pair q-1
    s0 = zbuf[:, :, 1:W + 1, :].reshape((TR + 2) * W, C2)    # column pair q
    sp = zbuf[:, :, 2:W + 2, :].reshape((TR + 2) * W, C2)    # column pair q+1

    acc = jnp.zeros((M, C2), f32)      # lane-dense [even cols | odd cols]
    acc_e = jnp.zeros((M, C), f32)     # w0 tap extra -> even output cols
    acc_o = jnp.zeros((M, C), f32)     # w2 tap extra -> odd output cols
    for di in range(3):                # static unroll over kernel rows
        off = di * W
        acc = acc + jnp.dot(s0[off:off + M, :], wcc[di],
                            preferred_element_type=f32)
        acc_e = acc_e + jnp.dot(sm[off:off + M, C:], w0s[di],
                                preferred_element_type=f32)
        acc_o = acc_o + jnp.dot(sp[off:off + M, 0:C], w2s[di],
                                preferred_element_type=f32)
    acc = acc + jnp.concatenate([acc_e, acc_o], axis=-1)

    # ---- bias + ReLU, one lane-dense full-block store ----
    res = jnp.maximum(acc + bc2[...], 0.0)
    o_ref[...] = res.reshape(TR, W, C2).astype(o_ref.dtype)


# ----------------------------------------------------------------------------
# Wrapper
# ----------------------------------------------------------------------------
def us_block_forward(before_pool, x, params, *, row_tile=None,
                     skip_dtype=jnp.bfloat16):
    """UsBlock forward pass (NHWC).

    before_pool: (N, 2H, 2W, Cout)   skip connection
    x:           (N, H,  W,  Cin)
    params = (wt, bt, wc, bc):
      wt: (Cin, 2, 2, Cout)   ConvTranspose2d weight laid out (ci, kh, kw, co)
      bt: (Cout,)             ConvTranspose2d bias
      wc: (3, 3, Cout, Cout)  Conv2d weight laid out (kh, kw, ci, co)
      bc: (Cout,)             Conv2d bias
    """
    wt, bt, wc, bc = params
    N, H, W, Cin = x.shape
    C = wt.shape[-1]
    C2 = 2 * C
    H2, W2 = 2 * H, 2 * W
    assert before_pool.shape == (N, H2, W2, C), before_pool.shape
    assert wt.shape == (Cin, 2, 2, C), wt.shape
    assert wc.shape == (3, 3, C, C), wc.shape

    # Generation-aware VMEM budgeting (128 MiB v5e/v6e, 64 MiB per core v7x).
    vmem_cap = _vmem_capacity_bytes()
    vmem_limit = min(int(vmem_cap * 0.75), vmem_cap - (8 << 20))
    skip_bytes = (jnp.dtype(skip_dtype).itemsize if skip_dtype is not None
                  else before_pool.dtype.itemsize)
    budget = int(vmem_limit * 0.8)
    TR = _pick_row_tile(H2, N, W, Cin, C2, skip_bytes, budget, row_tile=row_tile)
    TRX = TR // 2
    RB = H2 // TR

    # ---- parameter / activation plumbing ----
    # ConvTranspose2d weight pre-split by output-row parity; columns are (b, co).
    wte = wt[:, 0].reshape(Cin, C2).astype(jnp.bfloat16)   # even z rows (a = 0)
    wto = wt[:, 1].reshape(Cin, C2).astype(jnp.bfloat16)   # odd  z rows (a = 1)
    bt2 = jnp.concatenate([bt, bt]).reshape(1, C2).astype(jnp.float32)
    # 3x3 conv weights packed for the paired-lane (even|odd column) output:
    #   acc[:, :C] += sE@w1 + sO@w2  ;  acc[:, C:] += sE@w0 + sO@w1
    wcb = wc.astype(jnp.bfloat16)
    w0, w1, w2 = wcb[:, 0], wcb[:, 1], wcb[:, 2]           # (3, C, C) each
    wcc = jnp.concatenate(
        [jnp.concatenate([w1, w0], axis=-1),
         jnp.concatenate([w2, w1], axis=-1)], axis=1)      # (3, 2C, 2C)
    bc2 = jnp.concatenate([bc, bc]).reshape(1, C2).astype(jnp.float32)

    # Skip connection: fold (2W, C) -> (W, 2C) paired lanes and split the row
    # parity into its own axis (both free reshapes) so even / odd z rows are
    # plain BlockSpec fetches.  Stored bf16 to halve the dominant HBM stream.
    skip5 = before_pool.reshape(N, H, 2, W, C2)
    if skip_dtype is not None and skip5.dtype != jnp.dtype(skip_dtype):
        skip5 = skip5.astype(skip_dtype)

    kern = functools.partial(_us_block_kernel, TR=TR, W=W, C=C)

    out_p = pl.pallas_call(
        kern,
        out_shape=jax.ShapeDtypeStruct((N, H2, W, C2), jnp.float32),
        grid_spec=pltpu.PrefetchScalarGridSpec(
            num_scalar_prefetch=0,
            grid=(N, RB),
            in_specs=[
                # x: center rows of this block + clamped single-row vertical halos.
                pl.BlockSpec((None, TRX, W, Cin), lambda n, r: (n, r, 0, 0)),
                pl.BlockSpec((None, None, W, Cin),
                             lambda n, r: (n, jnp.maximum(r * TRX - 1, 0), 0, 0)),
                pl.BlockSpec((None, None, W, Cin),
                             lambda n, r: (n, jnp.minimum((r + 1) * TRX, H - 1), 0, 0)),
                # skip (paired-lane, parity-split): even rows, odd rows, halos.
                pl.BlockSpec((None, TRX, None, W, C2), lambda n, r: (n, r, 0, 0, 0)),
                pl.BlockSpec((None, TRX, None, W, C2), lambda n, r: (n, r, 1, 0, 0)),
                pl.BlockSpec((None, None, None, W, C2),
                             lambda n, r: (n, jnp.maximum(r * TRX - 1, 0), 1, 0, 0)),
                pl.BlockSpec((None, None, None, W, C2),
                             lambda n, r: (n, jnp.minimum((r + 1) * TRX, H - 1), 0, 0, 0)),
                # weights / biases (whole, resident in VMEM).
                pl.BlockSpec((Cin, C2), lambda n, r: (0, 0)),
                pl.BlockSpec((Cin, C2), lambda n, r: (0, 0)),
                pl.BlockSpec((1, C2), lambda n, r: (0, 0)),
                pl.BlockSpec((3, C2, C2), lambda n, r: (0, 0, 0)),
                pl.BlockSpec((3, C, C), lambda n, r: (0, 0, 0)),
                pl.BlockSpec((3, C, C), lambda n, r: (0, 0, 0)),
                pl.BlockSpec((1, C2), lambda n, r: (0, 0)),
            ],
            out_specs=pl.BlockSpec((None, TR, W, C2), lambda n, r: (n, r, 0, 0)),
            scratch_shapes=[pltpu.VMEM((TRX + 1, 2, W + 2, C2), jnp.bfloat16)],
        ),
        compiler_params=pltpu.CompilerParams(
            dimension_semantics=("parallel", "parallel"),
            vmem_limit_bytes=int(vmem_limit),
        ),
    )(x, x, x, skip5, skip5, skip5, skip5, wte, wto, bt2, wcc, w0, w2, bc2)

    # Free reshape back to interleaved NHWC.
    return out_p.reshape(N, H2, W2, C)


# ----------------------------------------------------------------------------
# Pure-JAX reference (correctness check)
# ----------------------------------------------------------------------------
def reference(before_pool, x, params):
    wt, bt, wc, bc = params
    N, H, W, Cin = x.shape
    Cout = wt.shape[-1]
    y = jnp.einsum('nhwc,cabo->nhwabo', x, wt) + bt
    u = y.transpose(0, 1, 3, 2, 4, 5).reshape(N, 2 * H, 2 * W, Cout)
    z = u + before_pool
    zp = jnp.pad(z, ((0, 0), (1, 1), (1, 1), (0, 0)))
    out = jnp.zeros((N, 2 * H, 2 * W, Cout), jnp.float32)
    for di in range(3):
        for dj in range(3):
            out = out + jnp.einsum(
                'nhwc,co->nhwo',
                zp[:, di:di + 2 * H, dj:dj + 2 * W, :], wc[di, dj])
    return jnp.maximum(out + bc, 0.0)


if __name__ == "__main__":
    N, Cin, Cout, H, W = 2, 8, 4, 8, 8

    key = jax.random.PRNGKey(0)
    k1, k2, k3, k4, k5, k6 = jax.random.split(key, 6)

    # inputs (NHWC)
    x = jax.random.normal(k1, (N, H, W, Cin), jnp.float32)
    before_pool = jax.random.normal(k2, (N, 2 * H, 2 * W, Cout), jnp.float32)

    # parameters (PyTorch shapes, re-laid-out as documented)
    wt = jax.random.normal(k3, (Cin, 2, 2, Cout), jnp.float32) * 0.1   # ConvTranspose2d
    bt = jax.random.normal(k4, (Cout,), jnp.float32) * 0.1
    wc = jax.random.normal(k5, (3, 3, Cout, Cout), jnp.float32) * 0.1  # Conv2d 3x3
    bc = jax.random.normal(k6, (Cout,), jnp.float32) * 0.1
    params = (wt, bt, wc, bc)

    # row_tile=8 -> 2 row blocks per image, exercising the halo / clamping path.
    out = us_block_forward(before_pool, x, params, row_tile=8)
    out = jax.block_until_ready(out)

    ref = reference(before_pool, x, params)
    assert out.shape == (N, 2 * H, 2 * W, Cout), out.shape
    max_err = float(jnp.max(jnp.abs(out - ref)))
    # bf16 MXU operands / bf16 skip & scratch with f32 accumulation.
    assert bool(jnp.allclose(out, ref, atol=3e-2, rtol=3e-2)), max_err

    print("KERNEL_OK")
</pallas_src>

<mosaic_0001>
module attributes {stable_mosaic.version = 11 : i64} {
  func.func @_us_block_kernel(%arg0: i32, %arg1: i32, %arg2: memref<1x4x8x8xf32, #tpu.memory_space<vmem>>, %arg3: memref<1x1x8x8xf32, #tpu.memory_space<vmem>>, %arg4: memref<1x1x8x8xf32, #tpu.memory_space<vmem>>, %arg5: memref<1x4x1x8x8xbf16, #tpu.memory_space<vmem>>, %arg6: memref<1x4x1x8x8xbf16, #tpu.memory_space<vmem>>, %arg7: memref<1x1x1x8x8xbf16, #tpu.memory_space<vmem>>, %arg8: memref<1x1x1x8x8xbf16, #tpu.memory_space<vmem>>, %arg9: memref<8x8xbf16, #tpu.memory_space<vmem>>, %arg10: memref<8x8xbf16, #tpu.memory_space<vmem>>, %arg11: memref<1x8xf32, #tpu.memory_space<vmem>>, %arg12: memref<3x8x8xbf16, #tpu.memory_space<vmem>>, %arg13: memref<3x4x4xbf16, #tpu.memory_space<vmem>>, %arg14: memref<3x4x4xbf16, #tpu.memory_space<vmem>>, %arg15: memref<1x8xf32, #tpu.memory_space<vmem>>, %arg16: memref<1x8x8x8xf32, #tpu.memory_space<vmem>>, %arg17: memref<5x2x10x8xbf16, #tpu.memory_space<vmem>>) attributes {dimension_semantics = [#tpu.dimension_semantics<parallel>, #tpu.dimension_semantics<parallel>], iteration_bounds = array<i64: 2, 2>, scalar_prefetch = 0 : i64, scratch_operands = 1 : i64, tpu.core_type = #tpu.core_type<tc>, window_params = [{transform_indices = @transform_0, window_bounds = array<i64: 1, 4, 8, 8>}, {transform_indices = @transform_1, window_bounds = array<i64: 1, 1, 8, 8>}, {transform_indices = @transform_2, window_bounds = array<i64: 1, 1, 8, 8>}, {transform_indices = @transform_3, window_bounds = array<i64: 1, 4, 1, 8, 8>}, {transform_indices = @transform_4, window_bounds = array<i64: 1, 4, 1, 8, 8>}, {transform_indices = @transform_5, window_bounds = array<i64: 1, 1, 1, 8, 8>}, {transform_indices = @transform_6, window_bounds = array<i64: 1, 1, 1, 8, 8>}, {pipeline_mode = #tpu.pipeline_mode<synchronous>, transform_indices = @transform_7, window_bounds = array<i64: 8, 8>}, {pipeline_mode = #tpu.pipeline_mode<synchronous>, transform_indices = @transform_8, window_bounds = array<i64: 8, 8>}, {pipeline_mode = #tpu.pipeline_mode<synchronous>, transform_indices = @transform_9, window_bounds = array<i64: 1, 8>}, {pipeline_mode = #tpu.pipeline_mode<synchronous>, transform_indices = @transform_10, window_bounds = array<i64: 3, 8, 8>}, {pipeline_mode = #tpu.pipeline_mode<synchronous>, transform_indices = @transform_11, window_bounds = array<i64: 3, 4, 4>}, {pipeline_mode = #tpu.pipeline_mode<synchronous>, transform_indices = @transform_12, window_bounds = array<i64: 3, 4, 4>}, {pipeline_mode = #tpu.pipeline_mode<synchronous>, transform_indices = @transform_13, window_bounds = array<i64: 1, 8>}, {transform_indices = @transform_14, window_bounds = array<i64: 1, 8, 8, 8>}]} {
    %cst = arith.constant 0.000000e+00 : bf16
    %0 = vector.broadcast %cst : bf16 to vector<5x2x8xbf16>
    %c0 = arith.constant 0 : index
    %c0_0 = arith.constant 0 : index
    %c0_1 = arith.constant 0 : index
    %c0_2 = arith.constant 0 : index
    %1 = vector.load %arg17[%c0, %c0_0, %c0_1, %c0_2] : memref<5x2x10x8xbf16, #tpu.memory_space<vmem>>, vector<5x2x1x8xbf16>
    %2 = vector.shape_cast %1 : vector<5x2x1x8xbf16> to vector<5x2x8xbf16>
    %3 = vector.shape_cast %0 : vector<5x2x8xbf16> to vector<5x2x1x8xbf16>
    tpu.vector_store %arg17[%c0, %c0_0, %c0_1, %c0_2], %3 {strides = array<i32>} : memref<5x2x10x8xbf16, #tpu.memory_space<vmem>>, vector<5x2x1x8xbf16>,
    %c0_3 = arith.constant 0 : index
    %c0_4 = arith.constant 0 : index
    %c9 = arith.constant 9 : index
    %c0_5 = arith.constant 0 : index
    %4 = vector.load %arg17[%c0_3, %c0_4, %c9, %c0_5] : memref<5x2x10x8xbf16, #tpu.memory_space<vmem>>, vector<5x2x1x8xbf16>
    %5 = vector.shape_cast %4 : vector<5x2x1x8xbf16> to vector<5x2x8xbf16>
    %6 = vector.shape_cast %0 : vector<5x2x8xbf16> to vector<5x2x1x8xbf16>
    tpu.vector_store %arg17[%c0_3, %c0_4, %c9, %c0_5], %6 {strides = array<i32>} : memref<5x2x10x8xbf16, #tpu.memory_space<vmem>>, vector<5x2x1x8xbf16>,
    %c0_6 = arith.constant 0 : index
    %c0_7 = arith.constant 0 : index
    %7 = vector.load %arg11[%c0_6, %c0_7] : memref<1x8xf32, #tpu.memory_space<vmem>>, vector<1x8xf32>
    %c0_8 = arith.constant 0 : index
    %c0_9 = arith.constant 0 : index
    %c0_10 = arith.constant 0 : index
    %c0_11 = arith.constant 0 : index
    %8 = vector.load %arg2[%c0_8, %c0_9, %c0_10, %c0_11] : memref<1x4x8x8xf32, #tpu.memory_space<vmem>>, vector<1x4x8x8xf32>
    %9 = vector.shape_cast %8 : vector<1x4x8x8xf32> to vector<4x8x8xf32>
    %10 = vector.shape_cast %9 : vector<4x8x8xf32> to vector<32x8xf32>
    %11 = arith.truncf %10 : vector<32x8xf32> to vector<32x8xbf16>
    %c0_12 = arith.constant 0 : index
    %c0_13 = arith.constant 0 : index
    %12 = vector.load %arg9[%c0_12, %c0_13] : memref<8x8xbf16, #tpu.memory_space<vmem>>, vector<8x8xbf16>
    %cst_14 = arith.constant dense<0.000000e+00> : vector<32x8xf32>
    %13 = tpu.matmul %11, %12, %cst_14 {dimension_numbers = #tpu.dot_dimension_numbers<[1], [0], [0], [1], [0, 0, 1, 1], [], []>} : vector<32x8xbf16>, vector<8x8xbf16>, vector<32x8xf32> -> vector<32x8xf32>
    %c0_15 = arith.constant 0 : index
    %c0_16 = arith.constant 0 : index
    %14 = vector.load %arg10[%c0_15, %c0_16] : memref<8x8xbf16, #tpu.memory_space<vmem>>, vector<8x8xbf16>
    %cst_17 = arith.constant dense<0.000000e+00> : vector<32x8xf32>
    %15 = tpu.matmul %11, %14, %cst_17 {dimension_numbers = #tpu.dot_dimension_numbers<[1], [0], [0], [1], [0, 0, 1, 1], [], []>} : vector<32x8xbf16>, vector<8x8xbf16>, vector<32x8xf32> -> vector<32x8xf32>
    %16 = vector.broadcast %7 : vector<1x8xf32> to vector<32x8xf32>
    %17 = arith.addf %13, %16 : vector<32x8xf32>
    %18 = vector.shape_cast %17 : vector<32x8xf32> to vector<4x8x8xf32>
    %c0_18 = arith.constant 0 : index
    %c0_19 = arith.constant 0 : index
    %c0_20 = arith.constant 0 : index
    %c0_21 = arith.constant 0 : index
    %c0_22 = arith.constant 0 : index
    %19 = vector.load %arg5[%c0_18, %c0_19, %c0_20, %c0_21, %c0_22] : memref<1x4x1x8x8xbf16, #tpu.memory_space<vmem>>, vector<1x4x1x8x8xbf16>
    %20 = vector.shape_cast %19 : vector<1x4x1x8x8xbf16> to vector<4x8x8xbf16>
    %21 = arith.extf %20 : vector<4x8x8xbf16> to vector<4x8x8xf32>
    %22 = arith.addf %18, %21 : vector<4x8x8xf32>
    %23 = vector.broadcast %7 : vector<1x8xf32> to vector<32x8xf32>
    %24 = arith.addf %15, %23 : vector<32x8xf32>
    %25 = vector.shape_cast %24 : vector<32x8xf32> to vector<4x8x8xf32>
    %c0_23 = arith.constant 0 : index
    %c0_24 = arith.constant 0 : index
    %c0_25 = arith.constant 0 : index
    %c0_26 = arith.constant 0 : index
    %c0_27 = arith.constant 0 : index
    %26 = vector.load %arg6[%c0_23, %c0_24, %c0_25, %c0_26, %c0_27] : memref<1x4x1x8x8xbf16, #tpu.memory_space<vmem>>, vector<1x4x1x8x8xbf16>
    %27 = vector.shape_cast %26 : vector<1x4x1x8x8xbf16> to vector<4x8x8xbf16>
    %28 = arith.extf %27 : vector<4x8x8xbf16> to vector<4x8x8xf32>
    %29 = arith.addf %25, %28 : vector<4x8x8xf32>
    %30 = arith.truncf %22 : vector<4x8x8xf32> to vector<4x8x8xbf16>
    %c0_28 = arith.constant 0 : index
    %c1 = arith.constant 1 : index
    %c1_29 = arith.constant 1 : index
    %c0_30 = arith.constant 0 : index
    %31 = vector.load %arg17[%c0_28, %c1, %c1_29, %c0_30] : memref<5x2x10x8xbf16, #tpu.memory_space<vmem>>, vector<4x1x8x8xbf16>
    %32 = vector.shape_cast %31 : vector<4x1x8x8xbf16> to vector<4x8x8xbf16>
    %33 = vector.shape_cast %30 : vector<4x8x8xbf16> to vector<4x1x8x8xbf16>
    tpu.vector_store %arg17[%c0_28, %c1, %c1_29, %c0_30], %33 {strides = array<i32>} : memref<5x2x10x8xbf16, #tpu.memory_space<vmem>>, vector<4x1x8x8xbf16>,
    %34 = arith.truncf %29 : vector<4x8x8xf32> to vector<4x8x8xbf16>
    %c1_31 = arith.constant 1 : index
    %c0_32 = arith.constant 0 : index
    %c1_33 = arith.constant 1 : index
    %c0_34 = arith.constant 0 : index
    %35 = vector.load %arg17[%c1_31, %c0_32, %c1_33, %c0_34] : memref<5x2x10x8xbf16, #tpu.memory_space<vmem>>, vector<4x1x8x8xbf16>
    %36 = vector.shape_cast %35 : vector<4x1x8x8xbf16> to vector<4x8x8xbf16>
    %37 = vector.shape_cast %34 : vector<4x8x8xbf16> to vector<4x1x8x8xbf16>
    tpu.vector_store %arg17[%c1_31, %c0_32, %c1_33, %c0_34], %37 {strides = array<i32>} : memref<5x2x10x8xbf16, #tpu.memory_space<vmem>>, vector<4x1x8x8xbf16>,
    %c0_35 = arith.constant 0 : index
    %c0_36 = arith.constant 0 : index
    %c0_37 = arith.constant 0 : index
    %c0_38 = arith.constant 0 : index
    %38 = vector.load %arg3[%c0_35, %c0_36, %c0_37, %c0_38] : memref<1x1x8x8xf32, #tpu.memory_space<vmem>>, vector<1x1x8x8xf32>
    %39 = vector.shape_cast %38 : vector<1x1x8x8xf32> to vector<8x8xf32>
    %40 = arith.truncf %39 : vector<8x8xf32> to vector<8x8xbf16>
    %c0_39 = arith.constant 0 : index
    %c0_40 = arith.constant 0 : index
    %41 = vector.load %arg10[%c0_39, %c0_40] : memref<8x8xbf16, #tpu.memory_space<vmem>>, vector<8x8xbf16>
    %cst_41 = arith.constant dense<0.000000e+00> : vector<8x8xf32>
    %42 = tpu.matmul %40, %41, %cst_41 {dimension_numbers = #tpu.dot_dimension_numbers<[1], [0], [0], [1], [0, 0, 1, 1], [], []>} : vector<8x8xbf16>, vector<8x8xbf16>, vector<8x8xf32> -> vector<8x8xf32>
    %43 = vector.broadcast %7 : vector<1x8xf32> to vector<8x8xf32>
    %44 = arith.addf %42, %43 : vector<8x8xf32>
    %c0_42 = arith.constant 0 : index
    %c0_43 = arith.constant 0 : index
    %c0_44 = arith.constant 0 : index
    %c0_45 = arith.constant 0 : index
    %c0_46 = arith.constant 0 : index
    %45 = vector.load %arg7[%c0_42, %c0_43, %c0_44, %c0_45, %c0_46] : memref<1x1x1x8x8xbf16, #tpu.memory_space<vmem>>, vector<1x1x1x8x8xbf16>
    %46 = vector.shape_cast %45 : vector<1x1x1x8x8xbf16> to vector<8x8xbf16>
    %47 = arith.extf %46 : vector<8x8xbf16> to vector<8x8xf32>
    %48 = arith.addf %44, %47 : vector<8x8xf32>
    %c0_i32 = arith.constant 0 : i32
    %49 = arith.cmpi sgt, %arg1, %c0_i32 : i32
    %cst_47 = arith.constant 0.000000e+00 : f32
    %50 = vector.broadcast %cst_47 : f32 to vector<8x8xf32>
    %51 = arith.select %49, %48, %50 : vector<8x8xf32>
    %52 = arith.truncf %51 : vector<8x8xf32> to vector<8x8xbf16>
    %c0_48 = arith.constant 0 : index
    %c0_49 = arith.constant 0 : index
    %c1_50 = arith.constant 1 : index
    %c0_51 = arith.constant 0 : index
    %53 = vector.load %arg17[%c0_48, %c0_49, %c1_50, %c0_51] : memref<5x2x10x8xbf16, #tpu.memory_space<vmem>>, vector<1x1x8x8xbf16>
    %54 = vector.shape_cast %53 : vector<1x1x8x8xbf16> to vector<8x8xbf16>
    %55 = vector.shape_cast %52 : vector<8x8xbf16> to vector<1x1x8x8xbf16>
    tpu.vector_store %arg17[%c0_48, %c0_49, %c1_50, %c0_51], %55 {strides = array<i32>} : memref<5x2x10x8xbf16, #tpu.memory_space<vmem>>, vector<1x1x8x8xbf16>,
    %c0_52 = arith.constant 0 : index
    %c0_53 = arith.constant 0 : index
    %c0_54 = arith.constant 0 : index
    %c0_55 = arith.constant 0 : index
    %56 = vector.load %arg4[%c0_52, %c0_53, %c0_54, %c0_55] : memref<1x1x8x8xf32, #tpu.memory_space<vmem>>, vector<1x1x8x8xf32>
    %57 = vector.shape_cast %56 : vector<1x1x8x8xf32> to vector<8x8xf32>
    %58 = arith.truncf %57 : vector<8x8xf32> to vector<8x8xbf16>
    %c0_56 = arith.constant 0 : index
    %c0_57 = arith.constant 0 : index
    %59 = vector.load %arg9[%c0_56, %c0_57] : memref<8x8xbf16, #tpu.memory_space<vmem>>, vector<8x8xbf16>
    %cst_58 = arith.constant dense<0.000000e+00> : vector<8x8xf32>
    %60 = tpu.matmul %58, %59, %cst_58 {dimension_numbers = #tpu.dot_dimension_numbers<[1], [0], [0], [1], [0, 0, 1, 1], [], []>} : vector<8x8xbf16>, vector<8x8xbf16>, vector<8x8xf32> -> vector<8x8xf32>
    %61 = vector.broadcast %7 : vector<1x8xf32> to vector<8x8xf32>
    %62 = arith.addf %60, %61 : vector<8x8xf32>
    %c0_59 = arith.constant 0 : index
    %c0_60 = arith.constant 0 : index
    %c0_61 = arith.constant 0 : index
    %c0_62 = arith.constant 0 : index
    %c0_63 = arith.constant 0 : index
    %63 = vector.load %arg8[%c0_59, %c0_60, %c0_61, %c0_62, %c0_63] : memref<1x1x1x8x8xbf16, #tpu.memory_space<vmem>>, vector<1x1x1x8x8xbf16>
    %64 = vector.shape_cast %63 : vector<1x1x1x8x8xbf16> to vector<8x8xbf16>
    %65 = arith.extf %64 : vector<8x8xbf16> to vector<8x8xf32>
    %66 = arith.addf %62, %65 : vector<8x8xf32>
    %c1_i32 = arith.constant 1 : i32
    %67 = arith.cmpi slt, %arg1, %c1_i32 : i32
    %cst_64 = arith.constant 0.000000e+00 : f32
    %68 = vector.broadcast %cst_64 : f32 to vector<8x8xf32>
    %69 = arith.select %67, %66, %68 : vector<8x8xf32>
    %70 = arith.truncf %69 : vector<8x8xf32> to vector<8x8xbf16>
    %c4 = arith.constant 4 : index
    %c1_65 = arith.constant 1 : index
    %c1_66 = arith.constant 1 : index
    %c0_67 = arith.constant 0 : index
    %71 = vector.load %arg17[%c4, %c1_65, %c1_66, %c0_67] : memref<5x2x10x8xbf16, #tpu.memory_space<vmem>>, vector<1x1x8x8xbf16>
    %72 = vector.shape_cast %71 : vector<1x1x8x8xbf16> to vector<8x8xbf16>
    %73 = vector.shape_cast %70 : vector<8x8xbf16> to vector<1x1x8x8xbf16>
    tpu.vector_store %arg17[%c4, %c1_65, %c1_66, %c0_67], %73 {strides = array<i32>} : memref<5x2x10x8xbf16, #tpu.memory_space<vmem>>, vector<1x1x8x8xbf16>,
    %c0_68 = arith.constant 0 : index
    %c0_69 = arith.constant 0 : index
    %c0_70 = arith.constant 0 : index
    %c0_71 = arith.constant 0 : index
    %74 = vector.load %arg17[%c0_68, %c0_69, %c0_70, %c0_71] : memref<5x2x10x8xbf16, #tpu.memory_space<vmem>>, vector<5x2x8x8xbf16>
    %75 = vector.shape_cast %74 : vector<5x2x8x8xbf16> to vector<80x8xbf16>
    %c0_72 = arith.constant 0 : index
    %c0_73 = arith.constant 0 : index
    %c1_74 = arith.constant 1 : index
    %c0_75 = arith.constant 0 : index
    %76 = vector.load %arg17[%c0_72, %c0_73, %c1_74, %c0_75] : memref<5x2x10x8xbf16, #tpu.memory_space<vmem>>, vector<5x2x8x8xbf16>
    %77 = vector.shape_cast %76 : vector<5x2x8x8xbf16> to vector<80x8xbf16>
    %c0_76 = arith.constant 0 : index
    %c0_77 = arith.constant 0 : index
    %c2 = arith.constant 2 : index
    %c0_78 = arith.constant 0 : index
    %78 = vector.load %arg17[%c0_76, %c0_77, %c2, %c0_78] : memref<5x2x10x8xbf16, #tpu.memory_space<vmem>>, vector<5x2x8x8xbf16>
    %79 = vector.shape_cast %78 : vector<5x2x8x8xbf16> to vector<80x8xbf16>
    %cst_79 = arith.constant 0.000000e+00 : f32
    %80 = vector.broadcast %cst_79 : f32 to vector<64x8xf32>
    %cst_80 = arith.constant 0.000000e+00 : f32
    %81 = vector.broadcast %cst_80 : f32 to vector<64x4xf32>
    %cst_81 = arith.constant 0.000000e+00 : f32
    %82 = vector.broadcast %cst_81 : f32 to vector<64x4xf32>
    %83 = vector.extract_strided_slice %77 {offsets = [0, 0], sizes = [64, 8], strides = [1, 1]} : vector<80x8xbf16> to vector<64x8xbf16>
    %c0_82 = arith.constant 0 : index
    %c0_83 = arith.constant 0 : index
    %c0_84 = arith.constant 0 : index
    %84 = vector.load %arg12[%c0_82, %c0_83, %c0_84] : memref<3x8x8xbf16, #tpu.memory_space<vmem>>, vector<1x8x8xbf16>
    %85 = vector.shape_cast %84 : vector<1x8x8xbf16> to vector<8x8xbf16>
    %cst_85 = arith.constant dense<0.000000e+00> : vector<64x8xf32>
    %86 = tpu.matmul %83, %85, %cst_85 {dimension_numbers = #tpu.dot_dimension_numbers<[1], [0], [0], [1], [0, 0, 1, 1], [], []>} : vector<64x8xbf16>, vector<8x8xbf16>, vector<64x8xf32> -> vector<64x8xf32>
    %87 = arith.addf %80, %86 : vector<64x8xf32>
    %88 = vector.extract_strided_slice %75 {offsets = [0, 4], sizes = [64, 4], strides = [1, 1]} : vector<80x8xbf16> to vector<64x4xbf16>
    %c0_86 = arith.constant 0 : index
    %c0_87 = arith.constant 0 : index
    %c0_88 = arith.constant 0 : index
    %89 = vector.load %arg13[%c0_86, %c0_87, %c0_88] : memref<3x4x4xbf16, #tpu.memory_space<vmem>>, vector<1x4x4xbf16>
    %90 = vector.shape_cast %89 : vector<1x4x4xbf16> to vector<4x4xbf16>
    %cst_89 = arith.constant dense<0.000000e+00> : vector<64x4xf32>
    %91 = tpu.matmul %88, %90, %cst_89 {dimension_numbers = #tpu.dot_dimension_numbers<[1], [0], [0], [1], [0, 0, 1, 1], [], []>} : vector<64x4xbf16>, vector<4x4xbf16>, vector<64x4xf32> -> vector<64x4xf32>
    %92 = arith.addf %81, %91 : vector<64x4xf32>
    %93 = vector.extract_strided_slice %79 {offsets = [0, 0], sizes = [64, 4], strides = [1, 1]} : vector<80x8xbf16> to vector<64x4xbf16>
    %c0_90 = arith.constant 0 : index
    %c0_91 = arith.constant 0 : index
    %c0_92 = arith.constant 0 : index
    %94 = vector.load %arg14[%c0_90, %c0_91, %c0_92] : memref<3x4x4xbf16, #tpu.memory_space<vmem>>, vector<1x4x4xbf16>
    %95 = vector.shape_cast %94 : vector<1x4x4xbf16> to vector<4x4xbf16>
    %cst_93 = arith.constant dense<0.000000e+00> : vector<64x4xf32>
    %96 = tpu.matmul %93, %95, %cst_93 {dimension_numbers = #tpu.dot_dimension_numbers<[1], [0], [0], [1], [0, 0, 1, 1], [], []>} : vector<64x4xbf16>, vector<4x4xbf16>, vector<64x4xf32> -> vector<64x4xf32>
    %97 = arith.addf %82, %96 : vector<64x4xf32>
    %98 = vector.extract_strided_slice %77 {offsets = [8, 0], sizes = [64, 8], strides = [1, 1]} : vector<80x8xbf16> to vector<64x8xbf16>
    %c1_94 = arith.constant 1 : index
    %c0_95 = arith.constant 0 : index
    %c0_96 = arith.constant 0 : index
    %99 = vector.load %arg12[%c1_94, %c0_95, %c0_96] : memref<3x8x8xbf16, #tpu.memory_space<vmem>>, vector<1x8x8xbf16>
    %100 = vector.shape_cast %99 : vector<1x8x8xbf16> to vector<8x8xbf16>
    %cst_97 = arith.constant dense<0.000000e+00> : vector<64x8xf32>
    %101 = tpu.matmul %98, %100, %cst_97 {dimension_numbers = #tpu.dot_dimension_numbers<[1], [0], [0], [1], [0, 0, 1, 1], [], []>} : vector<64x8xbf16>, vector<8x8xbf16>, vector<64x8xf32> -> vector<64x8xf32>
    %102 = arith.addf %87, %101 : vector<64x8xf32>
    %103 = vector.extract_strided_slice %75 {offsets = [8, 4], sizes = [64, 4], strides = [1, 1]} : vector<80x8xbf16> to vector<64x4xbf16>
    %c1_98 = arith.constant 1 : index
    %c0_99 = arith.constant 0 : index
    %c0_100 = arith.constant 0 : index
    %104 = vector.load %arg13[%c1_98, %c0_99, %c0_100] : memref<3x4x4xbf16, #tpu.memory_space<vmem>>, vector<1x4x4xbf16>
    %105 = vector.shape_cast %104 : vector<1x4x4xbf16> to vector<4x4xbf16>
    %cst_101 = arith.constant dense<0.000000e+00> : vector<64x4xf32>
    %106 = tpu.matmul %103, %105, %cst_101 {dimension_numbers = #tpu.dot_dimension_numbers<[1], [0], [0], [1], [0, 0, 1, 1], [], []>} : vector<64x4xbf16>, vector<4x4xbf16>, vector<64x4xf32> -> vector<64x4xf32>
    %107 = arith.addf %92, %106 : vector<64x4xf32>
    %108 = vector.extract_strided_slice %79 {offsets = [8, 0], sizes = [64, 4], strides = [1, 1]} : vector<80x8xbf16> to vector<64x4xbf16>
    %c1_102 = arith.constant 1 : index
    %c0_103 = arith.constant 0 : index
    %c0_104 = arith.constant 0 : index
    %109 = vector.load %arg14[%c1_102, %c0_103, %c0_104] : memref<3x4x4xbf16, #tpu.memory_space<vmem>>, vector<1x4x4xbf16>
    %110 = vector.shape_cast %109 : vector<1x4x4xbf16> to vector<4x4xbf16>
    %cst_105 = arith.constant dense<0.000000e+00> : vector<64x4xf32>
    %111 = tpu.matmul %108, %110, %cst_105 {dimension_numbers = #tpu.dot_dimension_numbers<[1], [0], [0], [1], [0, 0, 1, 1], [], []>} : vector<64x4xbf16>, vector<4x4xbf16>, vector<64x4xf32> -> vector<64x4xf32>
    %112 = arith.addf %97, %111 : vector<64x4xf32>
    %113 = vector.extract_strided_slice %77 {offsets = [16, 0], sizes = [64, 8], strides = [1, 1]} : vector<80x8xbf16> to vector<64x8xbf16>
    %c2_106 = arith.constant 2 : index
    %c0_107 = arith.constant 0 : index
    %c0_108 = arith.constant 0 : index
    %114 = vector.load %arg12[%c2_106, %c0_107, %c0_108] : memref<3x8x8xbf16, #tpu.memory_space<vmem>>, vector<1x8x8xbf16>
    %115 = vector.shape_cast %114 : vector<1x8x8xbf16> to vector<8x8xbf16>
    %cst_109 = arith.constant dense<0.000000e+00> : vector<64x8xf32>
    %116 = tpu.matmul %113, %115, %cst_109 {dimension_numbers = #tpu.dot_dimension_numbers<[1], [0], [0], [1], [0, 0, 1, 1], [], []>} : vector<64x8xbf16>, vector<8x8xbf16>, vector<64x8xf32> -> vector<64x8xf32>
    %117 = arith.addf %102, %116 : vector<64x8xf32>
    %118 = vector.extract_strided_slice %75 {offsets = [16, 4], sizes = [64, 4], strides = [1, 1]} : vector<80x8xbf16> to vector<64x4xbf16>
    %c2_110 = arith.constant 2 : index
    %c0_111 = arith.constant 0 : index
    %c0_112 = arith.constant 0 : index
    %119 = vector.load %arg13[%c2_110, %c0_111, %c0_112] : memref<3x4x4xbf16, #tpu.memory_space<vmem>>, vector<1x4x4xbf16>
    %120 = vector.shape_cast %119 : vector<1x4x4xbf16> to vector<4x4xbf16>
    %cst_113 = arith.constant dense<0.000000e+00> : vector<64x4xf32>
    %121 = tpu.matmul %118, %120, %cst_113 {dimension_numbers = #tpu.dot_dimension_numbers<[1], [0], [0], [1], [0, 0, 1, 1], [], []>} : vector<64x4xbf16>, vector<4x4xbf16>, vector<64x4xf32> -> vector<64x4xf32>
    %122 = arith.addf %107, %121 : vector<64x4xf32>
    %123 = vector.extract_strided_slice %79 {offsets = [16, 0], sizes = [64, 4], strides = [1, 1]} : vector<80x8xbf16> to vector<64x4xbf16>
    %c2_114 = arith.constant 2 : index
    %c0_115 = arith.constant 0 : index
    %c0_116 = arith.constant 0 : index
    %124 = vector.load %arg14[%c2_114, %c0_115, %c0_116] : memref<3x4x4xbf16, #tpu.memory_space<vmem>>, vector<1x4x4xbf16>
    %125 = vector.shape_cast %124 : vector<1x4x4xbf16> to vector<4x4xbf16>
    %cst_117 = arith.constant dense<0.000000e+00> : vector<64x4xf32>
    %126 = tpu.matmul %123, %125, %cst_117 {dimension_numbers = #tpu.dot_dimension_numbers<[1], [0], [0], [1], [0, 0, 1, 1], [], []>} : vector<64x4xbf16>, vector<4x4xbf16>, vector<64x4xf32> -> vector<64x4xf32>
    %127 = arith.addf %112, %126 : vector<64x4xf32>
    %128 = tpu.concatenate %122, %127 in 1 : vector<64x4xf32>, vector<64x4xf32> -> vector<64x8xf32>
    %129 = arith.addf %117, %128 : vector<64x8xf32>
    %c0_118 = arith.constant 0 : index
    %c0_119 = arith.constant 0 : index
    %130 = vector.load %arg15[%c0_118, %c0_119] : memref<1x8xf32, #tpu.memory_space<vmem>>, vector<1x8xf32>
    %131 = vector.broadcast %130 : vector<1x8xf32> to vector<64x8xf32>
    %132 = arith.addf %129, %131 : vector<64x8xf32>
    %cst_120 = arith.constant 0.000000e+00 : f32
    %133 = vector.broadcast %cst_120 : f32 to vector<64x8xf32>
    %134 = arith.maximumf %132, %133 : vector<64x8xf32>
    %135 = vector.shape_cast %134 : vector<64x8xf32> to vector<8x8x8xf32>
    %c0_121 = arith.constant 0 : index
    %c0_122 = arith.constant 0 : index
    %c0_123 = arith.constant 0 : index
    %c0_124 = arith.constant 0 : index
    %136 = vector.load %arg16[%c0_121, %c0_122, %c0_123, %c0_124] : memref<1x8x8x8xf32, #tpu.memory_space<vmem>>, vector<1x8x8x8xf32>
    %137 = vector.shape_cast %136 : vector<1x8x8x8xf32> to vector<8x8x8xf32>
    %138 = vector.shape_cast %135 : vector<8x8x8xf32> to vector<1x8x8x8xf32>
    tpu.vector_store %arg16[%c0_121, %c0_122, %c0_123, %c0_124], %138 {strides = array<i32>} : memref<1x8x8x8xf32, #tpu.memory_space<vmem>>, vector<1x8x8x8xf32>,
    return
  }
  func.func @transform_0(%arg0: i32, %arg1: i32) -> (i32, i32, i32, i32) {
    %c0_i32 = arith.constant 0 : i32
    %c0_i32_0 = arith.constant 0 : i32
    %c0_i32_1 = arith.constant 0 : i32
    return %arg0, %arg1, %c0_i32, %c0_i32_0 : i32, i32, i32, i32
  }
  func.func @transform_1(%arg0: i32, %arg1: i32) -> (i32, i32, i32, i32) {
    %c4_i32 = arith.constant 4 : i32
    %0 = arith.muli %arg1, %c4_i32 : i32
    %c1_i32 = arith.constant 1 : i32
    %1 = arith.subi %0, %c1_i32 : i32
    %c0_i32 = arith.constant 0 : i32
    %2 = arith.maxsi %1, %c0_i32 : i32
    %c0_i32_0 = arith.constant 0 : i32
    %c0_i32_1 = arith.constant 0 : i32
    %c0_i32_2 = arith.constant 0 : i32
    return %arg0, %2, %c0_i32_0, %c0_i32_1 : i32, i32, i32, i32
  }
  func.func @transform_2(%arg0: i32, %arg1: i32) -> (i32, i32, i32, i32) {
    %c1_i32 = arith.constant 1 : i32
    %0 = arith.addi %arg1, %c1_i32 : i32
    %c4_i32 = arith.constant 4 : i32
    %1 = arith.muli %0, %c4_i32 : i32
    %c7_i32 = arith.constant 7 : i32
    %2 = arith.minsi %1, %c7_i32 : i32
    %c0_i32 = arith.constant 0 : i32
    %c0_i32_0 = arith.constant 0 : i32
    %c0_i32_1 = arith.constant 0 : i32
    return %arg0, %2, %c0_i32, %c0_i32_0 : i32, i32, i32, i32
  }
  func.func @transform_3(%arg0: i32, %arg1: i32) -> (i32, i32, i32, i32, i32) {
    %c0_i32 = arith.constant 0 : i32
    %c0_i32_0 = arith.constant 0 : i32
    %c0_i32_1 = arith.constant 0 : i32
    %c0_i32_2 = arith.constant 0 : i32
    return %arg0, %arg1, %c0_i32, %c0_i32_0, %c0_i32_1 : i32, i32, i32, i32, i32
  }
  func.func @transform_4(%arg0: i32, %arg1: i32) -> (i32, i32, i32, i32, i32) {
    %c1_i32 = arith.constant 1 : i32
    %c0_i32 = arith.constant 0 : i32
    %c0_i32_0 = arith.constant 0 : i32
    %c0_i32_1 = arith.constant 0 : i32
    return %arg0, %arg1, %c1_i32, %c0_i32, %c0_i32_0 : i32, i32, i32, i32, i32
  }
  func.func @transform_5(%arg0: i32, %arg1: i32) -> (i32, i32, i32, i32, i32) {
    %c4_i32 = arith.constant 4 : i32
    %0 = arith.muli %arg1, %c4_i32 : i32
    %c1_i32 = arith.constant 1 : i32
    %1 = arith.subi %0, %c1_i32 : i32
    %c0_i32 = arith.constant 0 : i32
    %2 = arith.maxsi %1, %c0_i32 : i32
    %c1_i32_0 = arith.constant 1 : i32
    %c0_i32_1 = arith.constant 0 : i32
    %c0_i32_2 = arith.constant 0 : i32
    %c0_i32_3 = arith.constant 0 : i32
    return %arg0, %2, %c1_i32_0, %c0_i32_1, %c0_i32_2 : i32, i32, i32, i32, i32
  }
  func.func @transform_6(%arg0: i32, %arg1: i32) -> (i32, i32, i32, i32, i32) {
    %c1_i32 = arith.constant 1 : i32
    %0 = arith.addi %arg1, %c1_i32 : i32
    %c4_i32 = arith.constant 4 : i32
    %1 = arith.muli %0, %c4_i32 : i32
    %c7_i32 = arith.constant 7 : i32
    %2 = arith.minsi %1, %c7_i32 : i32
    %c0_i32 = arith.constant 0 : i32
    %c0_i32_0 = arith.constant 0 : i32
    %c0_i32_1 = arith.constant 0 : i32
    %c0_i32_2 = arith.constant 0 : i32
    return %arg0, %2, %c0_i32, %c0_i32_0, %c0_i32_1 : i32, i32, i32, i32, i32
  }
  func.func @transform_7(%arg0: i32, %arg1: i32) -> (i32, i32) {
    %c0_i32 = arith.constant 0 : i32
    %c0_i32_0 = arith.constant 0 : i32
    %c0_i32_1 = arith.constant 0 : i32
    return %c0_i32, %c0_i32_0 : i32, i32
  }
  func.func @transform_8(%arg0: i32, %arg1: i32) -> (i32, i32) {
    %c0_i32 = arith.constant 0 : i32
    %c0_i32_0 = arith.constant 0 : i32
    %c0_i32_1 = arith.constant 0 : i32
    return %c0_i32, %c0_i32_0 : i32, i32
  }
  func.func @transform_9(%arg0: i32, %arg1: i32) -> (i32, i32) {
    %c0_i32 = arith.constant 0 : i32
    %c0_i32_0 = arith.constant 0 : i32
    %c0_i32_1 = arith.constant 0 : i32
    return %c0_i32, %c0_i32_0 : i32, i32
  }
  func.func @transform_10(%arg0: i32, %arg1: i32) -> (i32, i32, i32) {
    %c0_i32 = arith.constant 0 : i32
    %c0_i32_0 = arith.constant 0 : i32
    %c0_i32_1 = arith.constant 0 : i32
    %c0_i32_2 = arith.constant 0 : i32
    return %c0_i32, %c0_i32_0, %c0_i32_1 : i32, i32, i32
  }
  func.func @transform_11(%arg0: i32, %arg1: i32) -> (i32, i32, i32) {
    %c0_i32 = arith.constant 0 : i32
    %c0_i32_0 = arith.constant 0 : i32
    %c0_i32_1 = arith.constant 0 : i32
    %c0_i32_2 = arith.constant 0 : i32
    return %c0_i32, %c0_i32_0, %c0_i32_1 : i32, i32, i32
  }
  func.func @transform_12(%arg0: i32, %arg1: i32) -> (i32, i32, i32) {
    %c0_i32 = arith.constant 0 : i32
    %c0_i32_0 = arith.constant 0 : i32
    %c0_i32_1 = arith.constant 0 : i32
    %c0_i32_2 = arith.constant 0 : i32
    return %c0_i32, %c0_i32_0, %c0_i32_1 : i32, i32, i32
  }
  func.func @transform_13(%arg0: i32, %arg1: i32) -> (i32, i32) {
    %c0_i32 = arith.constant 0 : i32
    %c0_i32_0 = arith.constant 0 : i32
    %c0_i32_1 = arith.constant 0 : i32
    return %c0_i32, %c0_i32_0 : i32, i32
  }
  func.func @transform_14(%arg0: i32, %arg1: i32) -> (i32, i32, i32, i32) {
    %c0_i32 = arith.constant 0 : i32
    %c0_i32_0 = arith.constant 0 : i32
    %c0_i32_1 = arith.constant 0 : i32
    return %arg0, %arg1, %c0_i32, %c0_i32_0 : i32, i32, i32, i32
  }
}

</mosaic_0001>

<llo_original>
// kernel: tpu_custom_call.1
$region0: #{tpu_custom_call.1}
  #allocation0 [shape = 'u32[]', space=smem, size = 0x4, offset = 0x4, fixed_abs, tag = 'smem constant byte address 0x4 - core index']
  #allocation1 [shape = 'u32[72,128]{1,0:T(1,128)}', space=vmem, size = 0x9000, scoped, tag = 'internal scratch']
  #allocation2 [shape = 'bf16[5,2,10,8]{3,2,1,0:T(8,128)(2,1)}', space=vmem, size = 0xa000, scoped, tag = 'scratch operand']
  %s0 = inlined_call_operand.hbm [shape: f32[2,8,8,8], index: 0, kind: input, shape index: {}]
  %s1 = inlined_call_operand.hbm [shape: f32[2,8,8,8], index: 1, kind: input, shape index: {}]
  %s2 = inlined_call_operand.hbm [shape: f32[2,8,8,8], index: 2, kind: input, shape index: {}]
  %s3 = inlined_call_operand.hbm [shape: bf16[2,8,2,8,8], index: 3, kind: input, shape index: {}]
  %s4 = inlined_call_operand.hbm [shape: bf16[2,8,2,8,8], index: 4, kind: input, shape index: {}]
  %s5 = inlined_call_operand.hbm [shape: bf16[2,8,2,8,8], index: 5, kind: input, shape index: {}]
  %s6 = inlined_call_operand.hbm [shape: bf16[2,8,2,8,8], index: 6, kind: input, shape index: {}]
  %s7 = inlined_call_operand.vmem [shape: bf16[8,8], index: 7, kind: input, shape index: {}]
  %s8 = inlined_call_operand.hbm [shape: bf16[8,8], index: 8, kind: input, shape index: {}]
  %s9 = inlined_call_operand.hbm [shape: f32[1,8], index: 9, kind: input, shape index: {}]
  %s10 = inlined_call_operand.hbm [shape: bf16[3,8,8], index: 10, kind: input, shape index: {}]
  %s11 = inlined_call_operand.vmem [shape: bf16[3,4,4], index: 11, kind: input, shape index: {}]
  %s12 = inlined_call_operand.hbm [shape: bf16[3,4,4], index: 12, kind: input, shape index: {}]
  %s13 = inlined_call_operand.vmem [shape: f32[1,8], index: 13, kind: input, shape index: {}]
  %s14 = inlined_call_operand.vmem [shape: f32[2,16,8,8], index: 14, kind: output, shape index: {}]
  %s15 = sld [smem:[#allocation0]]
  $region133: #{tpu_custom_call.1} parent=0
    _
  %s17 = ssub.s32 1, %s15
  %s18 = scalar_select 0, %s17, %s15
  $region1: #{tpu_custom_call.1} parent=0
    #allocation3 [shape = 'u8[32768]{0}', space=vmem, size = 0x8000, scoped, tag = 'input window, operand 0']
    #allocation4 [shape = 's32[2]{0}', space=sflag, size = 0x8, scoped, tag = 'scoped memory for tpu_custom_call.1']
    #allocation5 [shape = 'u8[8192]{0}', space=vmem, size = 0x2000, scoped, tag = 'input window, operand 1']
    #allocation6 [shape = 's32[2]{0}', space=sflag, size = 0x8, scoped, tag = 'scoped memory for tpu_custom_call.1']
    #allocation7 [shape = 'u8[8192]{0}', space=vmem, size = 0x2000, scoped, tag = 'input window, operand 2']
    #allocation8 [shape = 'u8[16384]{0}', space=vmem, size = 0x4000, scoped, tag = 'input window, operand 3']
    #allocation9 [shape = 's32[2]{0}', space=sflag, size = 0x8, scoped, tag = 'scoped memory for tpu_custom_call.1']
    #allocation10 [shape = 'u8[16384]{0}', space=vmem, size = 0x4000, scoped, tag = 'input window, operand 4']
    #allocation11 [shape = 'u8[4096]{0}', space=vmem, size = 0x1000, scoped, tag = 'input window, operand 5']
    #allocation12 [shape = 's32[2]{0}', space=sflag, size = 0x8, scoped, tag = 'scoped memory for tpu_custom_call.1']
    #allocation13 [shape = 'u8[4096]{0}', space=vmem, size = 0x1000, scoped, tag = 'input window, operand 6']
    #allocation14 [shape = 'u8[2048]{0}', space=vmem, size = 0x800, scoped, tag = 'input window, operand 8, single buffered']
    #allocation15 [shape = 's32[1]{0}', space=sflag, size = 0x4, scoped, tag = 'scoped memory for tpu_custom_call.1']
    #allocation16 [shape = 'u8[512]{0}', space=vmem, size = 0x400, scoped, tag = 'input window, operand 9, single buffered']
    #allocation17 [shape = 'u8[6144]{0}', space=vmem, size = 0x1800, scoped, tag = 'input window, operand 10, single buffered']
    #allocation18 [shape = 's32[1]{0}', space=sflag, size = 0x4, scoped, tag = 'scoped memory for tpu_custom_call.1']
    #allocation19 [shape = 'u8[3072]{0}', space=vmem, size = 0xc00, scoped, tag = 'input window, operand 12, single buffered']
    %19 = vsyncpa [#allocation4], 0
    %s20 = scalar_lea.sflag [#allocation4], 1
    %21 = vsyncpa %s20, 0
    %22 = vsyncpa [#allocation6], 0
    %s23 = scalar_lea.sflag [#allocation6], 1
    %24 = vsyncpa %s23, 0
    %25 = vsyncpa [#allocation9], 0
    %s26 = scalar_lea.sflag [#allocation9], 1
    %27 = vsyncpa %s26, 0
    %28 = vsyncpa [#allocation12], 0
    %s29 = scalar_lea.sflag [#allocation12], 1
    %30 = vsyncpa %s29, 0
    %31 = vsyncpa [#allocation15], 0
    %32 = vsyncpa [#allocation18], 0
    loop: start=0, step=1, limit=6
    $region2: #{tpu_custom_call.1} parent=1 // loop_pre_header
      _
    $region3: #{tpu_custom_call.1} parent=1 // loop_header
      %s34 = sphi 0, %s38
      %p35 = scmp.ge.s32.totalorder %s34, 6
      %s41 = sphi 0, %s53
      %s42 = sphi 0, %s49
      %s43 = sphi 0, %s41
      %s44 = sphi 0, %s42
      %s45 = sphi 0, %s43
      %s46 = sphi 0, %s44
      %s58 = sphi 0, %s60
      %s61 = sphi 0, %s58
      %s62 = sphi 0, %s61
      %s78 = sphi 0, %s62
      %s94 = sphi 0, %s96
      %s97 = sphi 0, %s94
      %s98 = sphi 0, %s97
      %s114 = sphi 0, %s98
      %s130 = sphi 0, %s132
      %s133 = sphi 0, %s130
      %s134 = sphi 0, %s133
      %s150 = sphi 0, %s134
      %s158 = sphi 0, %s160
      %s161 = sphi 0, %s158
      %s162 = sphi 0, %s161
      %s178 = sphi 0, %s162
      %s186 = sphi 0, %s188
      %s189 = sphi 0, %s186
      %s190 = sphi 0, %s189
      %s206 = sphi 0, %s190
      %s222 = sphi 0, %s224
      %s225 = sphi 0, %s222
      %s226 = sphi 0, %s225
      %s242 = sphi 0, %s226
      %s258 = sphi 0, %s260
      %s261 = sphi 0, %s258
      %s262 = sphi 0, %s261
      %s278 = sphi 0, %s262
      %s282 = sphi 0, %s282
      %s284 = sphi 0, %s282
      %s285 = sphi 0, %s284
      %s299 = sphi 0, %s285
      %s303 = sphi 0, %s303
      %s305 = sphi 0, %s303
      %s306 = sphi 0, %s305
      %s320 = sphi 0, %s306
      %s324 = sphi 0, %s324
      %s326 = sphi 0, %s324
      %s327 = sphi 0, %s326
      %s341 = sphi 0, %s327
      %s345 = sphi 0, %s345
      %s347 = sphi 0, %s345
      %s348 = sphi 0, %s347
      %s362 = sphi 0, %s348
      %s366 = sphi 0, %s366
      %s368 = sphi 0, %s366
      %s369 = sphi 0, %s368
      %s383 = sphi 0, %s369
      %s387 = sphi 0, %s387
      %s389 = sphi 0, %s387
      %s390 = sphi 0, %s389
      %s404 = sphi 0, %s390
      %s408 = sphi 0, %s408
      %s410 = sphi 0, %s408
      %s411 = sphi 0, %s410
      %s425 = sphi 0, %s411
      %s433 = sphi 0, %s435
      %s436 = sphi 0, %s433
      %s437 = sphi 0, %s436
      %s453 = sphi 0, %s437
    $region4: #{tpu_custom_call.1} parent=1 // loop_header_branch
      %37 = sbr.rel (%p35) target = $region8
    $region5: #{tpu_custom_call.1} parent=1 // loop_body
      %s39 = ssub.s32 %s34, 1
      %s40 = ssub.s32 %s34, 2
      %s47 = sadd.s32 1, %s42
      %p48 = scmp.ge.s32.totalorder %s47, 2
      %s49 = scalar_select %p48, 0, %s47
      %s50 = sadd.s32 1, %s41
      %s51 = scalar_select %p48, %s50, %s41
      %p52 = scmp.ge.s32.totalorder %s51, 2
      %s53 = scalar_select %p52, 0, %s51
      %s54 = ssub.s32 %s41, %s53
      %s55 = ssub.s32 %s42, %s49
      %s56 = sor.u32 %s54, %s55
      %p57 = scmp.eq.s32.totalorder %s56, 0
      %s59 = sadd.s32 %s58, 1
      %s60 = scalar_select %p57, %s58, %s59
      %p63 = pneg %p57
      %p64 = scmp.eq.s32.totalorder %s34, 3
      %p65 = por %p63, %p64
      %p66 = scmp.ne.s32.totalorder %s58, %s61
      %p67 = scmp.eq.s32.totalorder %s34, 0
      %p68 = por %p66, %p67
      %p69 = scmp.ne.s32.totalorder %s58, %s61
      %p70 = scmp.eq.s32.totalorder %s39, 3
      %p71 = por %p69, %p70
      %p72 = scmp.ne.s32.totalorder %s61, %s62
      %p73 = scmp.eq.s32.totalorder %s39, 0
      %p74 = por %p72, %p73
      %p75 = scmp.ne.s32.totalorder %s61, %s62
      %p76 = scmp.eq.s32.totalorder %s40, 3
      %p77 = por %p75, %p76
      %p79 = scmp.ne.s32.totalorder %s62, %s78
      %p80 = scmp.eq.s32.totalorder %s40, 0
      %p81 = por %p79, %p80
      %s82 = smul.u32 %s42, 4
      %s83 = ssub.s32 %s82, 1
      %p84 = scmp.gt.s32.totalorder %s83, 0
      %s85 = scalar_select %p84, %s83, 0
      %s86 = smul.u32 %s49, 4
      %s87 = ssub.s32 %s86, 1
      %p88 = scmp.gt.s32.totalorder %s87, 0
      %s89 = scalar_select %p88, %s87, 0
      %s90 = ssub.s32 %s41, %s53
      %s91 = ssub.s32 %s85, %s89
      %s92 = sor.u32 %s90, %s91
      %p93 = scmp.eq.s32.totalorder %s92, 0
      %s95 = sadd.s32 %s94, 1
      %s96 = scalar_select %p93, %s94, %s95
      %p99 = pneg %p93
      %p100 = scmp.eq.s32.totalorder %s34, 3
      %p101 = por %p99, %p100
      %p102 = scmp.ne.s32.totalorder %s94, %s97
      %p103 = scmp.eq.s32.totalorder %s34, 0
      %p104 = por %p102, %p103
      %p105 = scmp.ne.s32.totalorder %s94, %s97
      %p106 = scmp.eq.s32.totalorder %s39, 3
      %p107 = por %p105, %p106
      %p108 = scmp.ne.s32.totalorder %s97, %s98
      %p109 = scmp.eq.s32.totalorder %s39, 0
      %p110 = por %p108, %p109
      %p111 = scmp.ne.s32.totalorder %s97, %s98
      %p112 = scmp.eq.s32.totalorder %s40, 3
      %p113 = por %p111, %p112
      %p115 = scmp.ne.s32.totalorder %s98, %s114
      %p116 = scmp.eq.s32.totalorder %s40, 0
      %p117 = por %p115, %p116
      %s118 = sadd.s32 %s42, 1
      %s119 = smul.u32 %s118, 4
      %p120 = scmp.lt.s32.totalorder %s119, 7
      %s121 = scalar_select %p120, %s119, 7
      %s122 = sadd.s32 %s49, 1
      %s123 = smul.u32 %s122, 4
      %p124 = scmp.lt.s32.totalorder %s123, 7
      %s125 = scalar_select %p124, %s123, 7
      %s126 = ssub.s32 %s41, %s53
      %s127 = ssub.s32 %s121, %s125
      %s128 = sor.u32 %s126, %s127
      %p129 = scmp.eq.s32.totalorder %s128, 0
      %s131 = sadd.s32 %s130, 1
      %s132 = scalar_select %p129, %s130, %s131
      %p135 = pneg %p129
      %p136 = scmp.eq.s32.totalorder %s34, 3
      %p137 = por %p135, %p136
      %p138 = scmp.ne.s32.totalorder %s130, %s133
      %p139 = scmp.eq.s32.totalorder %s34, 0
      %p140 = por %p138, %p139
      %p141 = scmp.ne.s32.totalorder %s130, %s133
      %p142 = scmp.eq.s32.totalorder %s39, 3
      %p143 = por %p141, %p142
      %p144 = scmp.ne.s32.totalorder %s133, %s134
      %p145 = scmp.eq.s32.totalorder %s39, 0
      %p146 = por %p144, %p145
      %p147 = scmp.ne.s32.totalorder %s133, %s134
      %p148 = scmp.eq.s32.totalorder %s40, 3
      %p149 = por %p147, %p148
      %p151 = scmp.ne.s32.totalorder %s134, %s150
      %p152 = scmp.eq.s32.totalorder %s40, 0
      %p153 = por %p151, %p152
      %s154 = ssub.s32 %s41, %s53
      %s155 = ssub.s32 %s42, %s49
      %s156 = sor.u32 %s154, %s155
      %p157 = scmp.eq.s32.totalorder %s156, 0
      %s159 = sadd.s32 %s158, 1
      %s160 = scalar_select %p157, %s158, %s159
      %p163 = pneg %p157
      %p164 = scmp.eq.s32.totalorder %s34, 3
      %p165 = por %p163, %p164
      %p166 = scmp.ne.s32.totalorder %s158, %s161
      %p167 = scmp.eq.s32.totalorder %s34, 0
      %p168 = por %p166, %p167
      %p169 = scmp.ne.s32.totalorder %s158, %s161
      %p170 = scmp.eq.s32.totalorder %s39, 3
      %p171 = por %p169, %p170
      %p172 = scmp.ne.s32.totalorder %s161, %s162
      %p173 = scmp.eq.s32.totalorder %s39, 0
      %p174 = por %p172, %p173
      %p175 = scmp.ne.s32.totalorder %s161, %s162
      %p176 = scmp.eq.s32.totalorder %s40, 3
      %p177 = por %p175, %p176
      %p179 = scmp.ne.s32.totalorder %s162, %s178
      %p180 = scmp.eq.s32.totalorder %s40, 0
      %p181 = por %p179, %p180
      %s182 = ssub.s32 %s41, %s53
      %s183 = ssub.s32 %s42, %s49
      %s184 = sor.u32 %s182, %s183
      %p185 = scmp.eq.s32.totalorder %s184, 0
      %s187 = sadd.s32 %s186, 1
      %s188 = scalar_select %p185, %s186, %s187
      %p191 = pneg %p185
      %p192 = scmp.eq.s32.totalorder %s34, 3
      %p193 = por %p191, %p192
      %p194 = scmp.ne.s32.totalorder %s186, %s189
      %p195 = scmp.eq.s32.totalorder %s34, 0
      %p196 = por %p194, %p195
      %p197 = scmp.ne.s32.totalorder %s186, %s189
      %p198 = scmp.eq.s32.totalorder %s39, 3
      %p199 = por %p197, %p198
      %p200 = scmp.ne.s32.totalorder %s189, %s190
      %p201 = scmp.eq.s32.totalorder %s39, 0
      %p202 = por %p200, %p201
      %p203 = scmp.ne.s32.totalorder %s189, %s190
      %p204 = scmp.eq.s32.totalorder %s40, 3
      %p205 = por %p203, %p204
      %p207 = scmp.ne.s32.totalorder %s190, %s206
      %p208 = scmp.eq.s32.totalorder %s40, 0
      %p209 = por %p207, %p208
      %s210 = smul.u32 %s42, 4
      %s211 = ssub.s32 %s210, 1
      %p212 = scmp.gt.s32.totalorder %s211, 0
      %s213 = scalar_select %p212, %s211, 0
      %s214 = smul.u32 %s49, 4
      %s215 = ssub.s32 %s214, 1
      %p216 = scmp.gt.s32.totalorder %s215, 0
      %s217 = scalar_select %p216, %s215, 0
      %s218 = ssub.s32 %s41, %s53
      %s219 = ssub.s32 %s213, %s217
      %s220 = sor.u32 %s218, %s219
      %p221 = scmp.eq.s32.totalorder %s220, 0
      %s223 = sadd.s32 %s222, 1
      %s224 = scalar_select %p221, %s222, %s223
      %p227 = pneg %p221
      %p228 = scmp.eq.s32.totalorder %s34, 3
      %p229 = por %p227, %p228
      %p230 = scmp.ne.s32.totalorder %s222, %s225
      %p231 = scmp.eq.s32.totalorder %s34, 0
      %p232 = por %p230, %p231
      %p233 = scmp.ne.s32.totalorder %s222, %s225
      %p234 = scmp.eq.s32.totalorder %s39, 3
      %p235 = por %p233, %p234
      %p236 = scmp.ne.s32.totalorder %s225, %s226
      %p237 = scmp.eq.s32.totalorder %s39, 0
      %p238 = por %p236, %p237
      %p239 = scmp.ne.s32.totalorder %s225, %s226
      %p240 = scmp.eq.s32.totalorder %s40, 3
      %p241 = por %p239, %p240
      %p243 = scmp.ne.s32.totalorder %s226, %s242
      %p244 = scmp.eq.s32.totalorder %s40, 0
      %p245 = por %p243, %p244
      %s246 = sadd.s32 %s42, 1
      %s247 = smul.u32 %s246, 4
      %p248 = scmp.lt.s32.totalorder %s247, 7
      %s249 = scalar_select %p248, %s247, 7
      %s250 = sadd.s32 %s49, 1
      %s251 = smul.u32 %s250, 4
      %p252 = scmp.lt.s32.totalorder %s251, 7
      %s253 = scalar_select %p252, %s251, 7
      %s254 = ssub.s32 %s41, %s53
      %s255 = ssub.s32 %s249, %s253
      %s256 = sor.u32 %s254, %s255
      %p257 = scmp.eq.s32.totalorder %s256, 0
      %s259 = sadd.s32 %s258, 1
      %s260 = scalar_select %p257, %s258, %s259
      %p263 = pneg %p257
      %p264 = scmp.eq.s32.totalorder %s34, 3
      %p265 = por %p263, %p264
      %p266 = scmp.ne.s32.totalorder %s258, %s261
      %p267 = scmp.eq.s32.totalorder %s34, 0
      %p268 = por %p266, %p267
      %p269 = scmp.ne.s32.totalorder %s258, %s261
      %p270 = scmp.eq.s32.totalorder %s39, 3
      %p271 = por %p269, %p270
      %p272 = scmp.ne.s32.totalorder %s261, %s262
      %p273 = scmp.eq.s32.totalorder %s39, 0
      %p274 = por %p272, %p273
      %p275 = scmp.ne.s32.totalorder %s261, %s262
      %p276 = scmp.eq.s32.totalorder %s40, 3
      %p277 = por %p275, %p276
      %p279 = scmp.ne.s32.totalorder %s262, %s278
      %p280 = scmp.eq.s32.totalorder %s40, 0
      %p281 = por %p279, %p280
      %s283 = sadd.s32 %s282, 1
      %p286 = scmp.eq.s32.totalorder %s34, 3
      %p287 = scmp.ne.s32.totalorder %s282, %s284
      %p288 = scmp.eq.s32.totalorder %s34, 0
      %p289 = por %p287, %p288
      %p290 = scmp.ne.s32.totalorder %s282, %s284
      %p291 = scmp.eq.s32.totalorder %s39, 3
      %p292 = por %p290, %p291
      %p293 = scmp.ne.s32.totalorder %s284, %s285
      %p294 = scmp.eq.s32.totalorder %s39, 0
      %p295 = por %p293, %p294
      %p296 = scmp.ne.s32.totalorder %s284, %s285
      %p297 = scmp.eq.s32.totalorder %s40, 3
      %p298 = por %p296, %p297
      %p300 = scmp.ne.s32.totalorder %s285, %s299
      %p301 = scmp.eq.s32.totalorder %s40, 0
      %p302 = por %p300, %p301
      %s304 = sadd.s32 %s303, 1
      %p307 = scmp.eq.s32.totalorder %s34, 3
      %p308 = scmp.ne.s32.totalorder %s303, %s305
      %p309 = scmp.eq.s32.totalorder %s34, 0
      %p310 = por %p308, %p309
      %p311 = scmp.ne.s32.totalorder %s303, %s305
      %p312 = scmp.eq.s32.totalorder %s39, 3
      %p313 = por %p311, %p312
      %p314 = scmp.ne.s32.totalorder %s305, %s306
      %p315 = scmp.eq.s32.totalorder %s39, 0
      %p316 = por %p314, %p315
      %p317 = scmp.ne.s32.totalorder %s305, %s306
      %p318 = scmp.eq.s32.totalorder %s40, 3
      %p319 = por %p317, %p318
      %p321 = scmp.ne.s32.totalorder %s306, %s320
      %p322 = scmp.eq.s32.totalorder %s40, 0
      %p323 = por %p321, %p322
      %s325 = sadd.s32 %s324, 1
      %p328 = scmp.eq.s32.totalorder %s34, 3
      %p329 = scmp.ne.s32.totalorder %s324, %s326
      %p330 = scmp.eq.s32.totalorder %s34, 0
      %p331 = por %p329, %p330
      %p332 = scmp.ne.s32.totalorder %s324, %s326
      %p333 = scmp.eq.s32.totalorder %s39, 3
      %p334 = por %p332, %p333
      %p335 = scmp.ne.s32.totalorder %s326, %s327
      %p336 = scmp.eq.s32.totalorder %s39, 0
      %p337 = por %p335, %p336
      %p338 = scmp.ne.s32.totalorder %s326, %s327
      %p339 = scmp.eq.s32.totalorder %s40, 3
      %p340 = por %p338, %p339
      %p342 = scmp.ne.s32.totalorder %s327, %s341
      %p343 = scmp.eq.s32.totalorder %s40, 0
      %p344 = por %p342, %p343
      %s346 = sadd.s32 %s345, 1
      %p349 = scmp.eq.s32.totalorder %s34, 3
      %p350 = scmp.ne.s32.totalorder %s345, %s347
      %p351 = scmp.eq.s32.totalorder %s34, 0
      %p352 = por %p350, %p351
      %p353 = scmp.ne.s32.totalorder %s345, %s347
      %p354 = scmp.eq.s32.totalorder %s39, 3
      %p355 = por %p353, %p354
      %p356 = scmp.ne.s32.totalorder %s347, %s348
      %p357 = scmp.eq.s32.totalorder %s39, 0
      %p358 = por %p356, %p357
      %p359 = scmp.ne.s32.totalorder %s347, %s348
      %p360 = scmp.eq.s32.totalorder %s40, 3
      %p361 = por %p359, %p360
      %p363 = scmp.ne.s32.totalorder %s348, %s362
      %p364 = scmp.eq.s32.totalorder %s40, 0
      %p365 = por %p363, %p364
      %s367 = sadd.s32 %s366, 1
      %p370 = scmp.eq.s32.totalorder %s34, 3
      %p371 = scmp.ne.s32.totalorder %s366, %s368
      %p372 = scmp.eq.s32.totalorder %s34, 0
      %p373 = por %p371, %p372
      %p374 = scmp.ne.s32.totalorder %s366, %s368
      %p375 = scmp.eq.s32.totalorder %s39, 3
      %p376 = por %p374, %p375
      %p377 = scmp.ne.s32.totalorder %s368, %s369
      %p378 = scmp.eq.s32.totalorder %s39, 0
      %p379 = por %p377, %p378
      %p380 = scmp.ne.s32.totalorder %s368, %s369
      %p381 = scmp.eq.s32.totalorder %s40, 3
      %p382 = por %p380, %p381
      %p384 = scmp.ne.s32.totalorder %s369, %s383
      %p385 = scmp.eq.s32.totalorder %s40, 0
      %p386 = por %p384, %p385
      %s388 = sadd.s32 %s387, 1
      %p391 = scmp.eq.s32.totalorder %s34, 3
      %p392 = scmp.ne.s32.totalorder %s387, %s389
      %p393 = scmp.eq.s32.totalorder %s34, 0
      %p394 = por %p392, %p393
      %p395 = scmp.ne.s32.totalorder %s387, %s389
      %p396 = scmp.eq.s32.totalorder %s39, 3
      %p397 = por %p395, %p396
      %p398 = scmp.ne.s32.totalorder %s389, %s390
      %p399 = scmp.eq.s32.totalorder %s39, 0
      %p400 = por %p398, %p399
      %p401 = scmp.ne.s32.totalorder %s389, %s390
      %p402 = scmp.eq.s32.totalorder %s40, 3
      %p403 = por %p401, %p402
      %p405 = scmp.ne.s32.totalorder %s390, %s404
      %p406 = scmp.eq.s32.totalorder %s40, 0
      %p407 = por %p405, %p406
      %s409 = sadd.s32 %s408, 1
      %p412 = scmp.eq.s32.totalorder %s34, 3
      %p413 = scmp.ne.s32.totalorder %s408, %s410
      %p414 = scmp.eq.s32.totalorder %s34, 0
      %p415 = por %p413, %p414
      %p416 = scmp.ne.s32.totalorder %s408, %s410
      %p417 = scmp.eq.s32.totalorder %s39, 3
      %p418 = por %p416, %p417
      %p419 = scmp.ne.s32.totalorder %s410, %s411
      %p420 = scmp.eq.s32.totalorder %s39, 0
      %p421 = por %p419, %p420
      %p422 = scmp.ne.s32.totalorder %s410, %s411
      %p423 = scmp.eq.s32.totalorder %s40, 3
      %p424 = por %p422, %p423
      %p426 = scmp.ne.s32.totalorder %s411, %s425
      %p427 = scmp.eq.s32.totalorder %s40, 0
      %p428 = por %p426, %p427
      %s429 = ssub.s32 %s41, %s53
      %s430 = ssub.s32 %s42, %s49
      %s431 = sor.u32 %s429, %s430
      %p432 = scmp.eq.s32.totalorder %s431, 0
      %s434 = sadd.s32 %s433, 1
      %s435 = scalar_select %p432, %s433, %s434
      %p438 = pneg %p432
      %p439 = scmp.eq.s32.totalorder %s34, 3
      %p440 = por %p438, %p439
      %p441 = scmp.ne.s32.totalorder %s433, %s436
      %p442 = scmp.eq.s32.totalorder %s34, 0
      %p443 = por %p441, %p442
      %p444 = scmp.ne.s32.totalorder %s433, %s436
      %p445 = scmp.eq.s32.totalorder %s39, 3
      %p446 = por %p444, %p445
      %p447 = scmp.ne.s32.totalorder %s436, %s437
      %p448 = scmp.eq.s32.totalorder %s39, 0
      %p449 = por %p447, %p448
      %p450 = scmp.ne.s32.totalorder %s436, %s437
      %p451 = scmp.eq.s32.totalorder %s40, 3
      %p452 = por %p450, %p451
      %p454 = scmp.ne.s32.totalorder %s437, %s453
      %p455 = scmp.eq.s32.totalorder %s40, 0
      %p456 = por %p454, %p455
      %p457 = scmp.le.s32.totalorder 1, %s34
      %p458 = scmp.lt.s32.totalorder %s34, 5
      %p459 = pnand %p457, %p458
      %p460 = pneg %p459
      // Predicated region
      $region9: #{tpu_custom_call.1} parent=5 // pred_check
        _
      $region10: #{tpu_custom_call.1} parent=5 // pred_check_branch
        %462 = sbr.rel (%p459) target = $region12
      $region11: #{tpu_custom_call.1} parent=5 // pred_region
        %s463 = ssub.s32 %s34, 1
        // Predicated region
        $region13: #{tpu_custom_call.1} parent=11 // pred_check
          %p464 = pneg %p295
        $region14: #{tpu_custom_call.1} parent=11 // pred_check_branch
          %466 = sbr.rel (%p464) target = $region16
        $region15: #{tpu_custom_call.1} parent=11 // pred_region
          _
        $region16: #{tpu_custom_call.1} parent=11 // pred_fallthru
          _
        // Predicated region
        $region17: #{tpu_custom_call.1} parent=11 // pred_check
          %p467 = pneg %p316
        $region18: #{tpu_custom_call.1} parent=11 // pred_check_branch
          %469 = sbr.rel (%p467) target = $region20
        $region19: #{tpu_custom_call.1} parent=11 // pred_region
          %471 = vsyncadd [#allocation15], 0
          %s473 = sshll.u32 %s8, 4
          %s474 = int_to_ptr.hbm [resolvable:$true] %s473
          %s475 = sshll.u32 [#allocation14], 4
          %s476 = int_to_ptr.vmem [resolvable:$true] %s475
          %478 = dma.hbm_to_vmem [thread:$0]  %s474, 64, %s476, [#allocation15]
        $region20: #{tpu_custom_call.1} parent=11 // pred_fallthru
          _
        // Predicated region
        $region21: #{tpu_custom_call.1} parent=11 // pred_check
          %p479 = pneg %p337
        $region22: #{tpu_custom_call.1} parent=11 // pred_check_branch
          %481 = sbr.rel (%p479) target = $region24
        $region23: #{tpu_custom_call.1} parent=11 // pred_region
          %483 = vsyncadd [#allocation15], 0
          %s485 = sshll.u32 %s9, 4
          %s486 = int_to_ptr.hbm [resolvable:$true] %s485
          %s487 = sshll.u32 [#allocation16], 4
          %s488 = int_to_ptr.vmem [resolvable:$true] %s487
          %490 = dma.hbm_to_vmem [thread:$0]  %s486, 16, %s488, [#allocation15]
        $region24: #{tpu_custom_call.1} parent=11 // pred_fallthru
          _
        // Predicated region
        $region25: #{tpu_custom_call.1} parent=11 // pred_check
          %p491 = pneg %p358
        $region26: #{tpu_custom_call.1} parent=11 // pred_check_branch
          %493 = sbr.rel (%p491) target = $region28
        $region27: #{tpu_custom_call.1} parent=11 // pred_region
          %495 = vsyncadd [#allocation18], 0
          %s496 = sshll.u32 %s10, 4
          %s497 = int_to_ptr.hbm [resolvable:$true] %s496
          %s498 = sshll.u32 [#allocation17], 4
          %s499 = int_to_ptr.vmem [resolvable:$true] %s498
          %504 = dma.hbm_to_vmem [thread:$0]  %s497, 192, %s499, [#allocation18], 64, 64, 4
        $region28: #{tpu_custom_call.1} parent=11 // pred_fallthru
          _
        // Predicated region
        $region29: #{tpu_custom_call.1} parent=11 // pred_check
          %p505 = pneg %p379
        $region30: #{tpu_custom_call.1} parent=11 // pred_check_branch
          %507 = sbr.rel (%p505) target = $region32
        $region31: #{tpu_custom_call.1} parent=11 // pred_region
          _
        $region32: #{tpu_custom_call.1} parent=11 // pred_fallthru
          _
        // Predicated region
        $region33: #{tpu_custom_call.1} parent=11 // pred_check
          %p508 = pneg %p400
        $region34: #{tpu_custom_call.1} parent=11 // pred_check_branch
          %510 = sbr.rel (%p508) target = $region36
        $region35: #{tpu_custom_call.1} parent=11 // pred_region
          %512 = vsyncadd [#allocation18], 0
          %s513 = sshll.u32 %s12, 4
          %s514 = int_to_ptr.hbm [resolvable:$true] %s513
          %s515 = sshll.u32 [#allocation19], 4
          %s516 = int_to_ptr.vmem [resolvable:$true] %s515
          %521 = dma.hbm_to_vmem [thread:$0]  %s514, 96, %s516, [#allocation18], 32, 32, 2
        $region36: #{tpu_custom_call.1} parent=11 // pred_fallthru
          _
        // Predicated region
        $region37: #{tpu_custom_call.1} parent=11 // pred_check
          %p522 = pneg %p421
        $region38: #{tpu_custom_call.1} parent=11 // pred_check_branch
          %524 = sbr.rel (%p522) target = $region40
        $region39: #{tpu_custom_call.1} parent=11 // pred_region
          _
        $region40: #{tpu_custom_call.1} parent=11 // pred_fallthru
          _
      $region12: #{tpu_custom_call.1} parent=5 // pred_fallthru
        _
      %p525 = scmp.lt.s32.totalorder %s34, 4
      // Predicated region
      $region41: #{tpu_custom_call.1} parent=5 // pred_check
        %p526 = pneg %p525
      $region42: #{tpu_custom_call.1} parent=5 // pred_check_branch
        %528 = sbr.rel (%p526) target = $region44
      $region43: #{tpu_custom_call.1} parent=5 // pred_region
        // Predicated region
        $region45: #{tpu_custom_call.1} parent=43 // pred_check
          %p529 = pneg %p68
        $region46: #{tpu_custom_call.1} parent=43 // pred_check_branch
          %531 = sbr.rel (%p529) target = $region48
        $region47: #{tpu_custom_call.1} parent=43 // pred_region
          %s532 = sand.u32 %s58, 1
          %s533 = scalar_lea.sflag [#allocation4], %s532
          %s534 = sand.u32 %s58, 1
          %s535 = smul.addr %s534, 32
          %s536 = scalar_lea.vmem [#allocation3], %s535
          %s537 = smul.u32 4, %s42
          %539 = vsyncadd %s533, 0
          %s540 = smul.addr %s41, 8
          %s541 = sadd.s32 %s537, %s540
          %s542 = smul.addr %s541, 8
          %s543 = scalar_lea.hbm %s0, %s542
          %s544 = sshll.u32 %s543, 4
          %s545 = int_to_ptr.hbm [resolvable:$true] %s544
          %s546 = sshll.u32 %s536, 4
          %s547 = int_to_ptr.vmem [resolvable:$true] %s546
          %552 = dma.hbm_to_vmem [thread:$0]  %s545, 512, %s547, %s533, 128, 128, 8
        $region48: #{tpu_custom_call.1} parent=43 // pred_fallthru
          _
        // Predicated region
        $region49: #{tpu_custom_call.1} parent=43 // pred_check
          %p553 = pneg %p104
        $region50: #{tpu_custom_call.1} parent=43 // pred_check_branch
          %555 = sbr.rel (%p553) target = $region52
        $region51: #{tpu_custom_call.1} parent=43 // pred_region
          %s556 = sand.u32 %s34, 1
          %s557 = scalar_lea.sflag [#allocation6], %s556
          %s558 = sand.u32 %s94, 1
          %s559 = smul.addr %s558, 8
          %s560 = scalar_lea.vmem [#allocation5], %s559
          %s561 = smul.u32 %s42, 4
          %s562 = ssub.s32 %s561, 1
          %p563 = scmp.gt.s32.totalorder %s562, 0
          %s564 = scalar_select %p563, %s562, 0
          %566 = vsyncadd %s557, 0
          %s567 = smul.addr %s41, 8
          %s568 = sadd.s32 %s564, %s567
          %s569 = smul.addr %s568, 8
          %s570 = scalar_lea.hbm %s1, %s569
          %s572 = sshll.u32 %s570, 4
          %s573 = int_to_ptr.hbm [resolvable:$true] %s572
          %s574 = sshll.u32 %s560, 4
          %s575 = int_to_ptr.vmem [resolvable:$true] %s574
          %577 = dma.hbm_to_vmem [thread:$0]  %s573, 128, %s575, %s557
        $region52: #{tpu_custom_call.1} parent=43 // pred_fallthru
          _
        // Predicated region
        $region53: #{tpu_custom_call.1} parent=43 // pred_check
          %p578 = pneg %p140
        $region54: #{tpu_custom_call.1} parent=43 // pred_check_branch
          %580 = sbr.rel (%p578) target = $region56
        $region55: #{tpu_custom_call.1} parent=43 // pred_region
          %s581 = sand.u32 %s34, 1
          %s582 = scalar_lea.sflag [#allocation6], %s581
          %s583 = sand.u32 %s130, 1
          %s584 = smul.addr %s583, 8
          %s585 = scalar_lea.vmem [#allocation7], %s584
          %s586 = sadd.s32 %s42, 1
          %s587 = smul.u32 %s586, 4
          %p588 = scmp.lt.s32.totalorder %s587, 7
          %s589 = scalar_select %p588, %s587, 7
          %591 = vsyncadd %s582, 0
          %s592 = smul.addr %s41, 8
          %s593 = sadd.s32 %s589, %s592
          %s594 = smul.addr %s593, 8
          %s595 = scalar_lea.hbm %s2, %s594
          %s597 = sshll.u32 %s595, 4
          %s598 = int_to_ptr.hbm [resolvable:$true] %s597
          %s599 = sshll.u32 %s585, 4
          %s600 = int_to_ptr.vmem [resolvable:$true] %s599
          %602 = dma.hbm_to_vmem [thread:$0]  %s598, 128, %s600, %s582
        $region56: #{tpu_custom_call.1} parent=43 // pred_fallthru
          _
        // Predicated region
        $region57: #{tpu_custom_call.1} parent=43 // pred_check
          %p603 = pneg %p168
        $region58: #{tpu_custom_call.1} parent=43 // pred_check_branch
          %605 = sbr.rel (%p603) target = $region60
        $region59: #{tpu_custom_call.1} parent=43 // pred_region
          %s606 = sand.u32 %s34, 1
          %s607 = scalar_lea.sflag [#allocation9], %s606
          %s608 = sand.u32 %s158, 1
          %s609 = smul.addr %s608, 16
          %s610 = scalar_lea.vmem [#allocation8], %s609
          %s611 = smul.u32 4, %s42
          %613 = vsyncadd %s607, 0
          %s614 = smul.addr %s611, 2
          %s615 = smul.addr %s41, 16
          %s616 = sadd.s32 %s614, %s615
          %s617 = smul.addr %s616, 4
          %s618 = scalar_lea.hbm %s3, %s617
          %s619 = sshll.u32 %s618, 4
          %s620 = int_to_ptr.hbm [resolvable:$true] %s619
          %s621 = sshll.u32 %s610, 4
          %s622 = int_to_ptr.vmem [resolvable:$true] %s621
          %627 = dma.hbm_to_vmem [thread:$0]  %s620, 256, %s622, %s607, 128, 64, 4
        $region60: #{tpu_custom_call.1} parent=43 // pred_fallthru
          _
        // Predicated region
        $region61: #{tpu_custom_call.1} parent=43 // pred_check
          %p628 = pneg %p196
        $region62: #{tpu_custom_call.1} parent=43 // pred_check_branch
          %630 = sbr.rel (%p628) target = $region64
        $region63: #{tpu_custom_call.1} parent=43 // pred_region
          %s631 = sand.u32 %s34, 1
          %s632 = scalar_lea.sflag [#allocation9], %s631
          %s633 = sand.u32 %s186, 1
          %s634 = smul.addr %s633, 16
          %s635 = scalar_lea.vmem [#allocation10], %s634
          %s636 = smul.u32 4, %s42
          %638 = vsyncadd %s632, 0
          %s639 = smul.addr %s636, 2
          %s640 = sadd.s32 1, %s639
          %s641 = smul.addr %s41, 16
          %s642 = sadd.s32 %s640, %s641
          %s643 = smul.addr %s642, 4
          %s644 = scalar_lea.hbm %s4, %s643
          %s645 = sshll.u32 %s644, 4
          %s646 = int_to_ptr.hbm [resolvable:$true] %s645
          %s647 = sshll.u32 %s635, 4
          %s648 = int_to_ptr.vmem [resolvable:$true] %s647
          %653 = dma.hbm_to_vmem [thread:$0]  %s646, 256, %s648, %s632, 128, 64, 4
        $region64: #{tpu_custom_call.1} parent=43 // pred_fallthru
          _
        // Predicated region
        $region65: #{tpu_custom_call.1} parent=43 // pred_check
          %p654 = pneg %p232
        $region66: #{tpu_custom_call.1} parent=43 // pred_check_branch
          %656 = sbr.rel (%p654) target = $region68
        $region67: #{tpu_custom_call.1} parent=43 // pred_region
          %s657 = sand.u32 %s34, 1
          %s658 = scalar_lea.sflag [#allocation12], %s657
          %s659 = sand.u32 %s222, 1
          %s660 = smul.addr %s659, 4
          %s661 = scalar_lea.vmem [#allocation11], %s660
          %s662 = smul.u32 %s42, 4
          %s663 = ssub.s32 %s662, 1
          %p664 = scmp.gt.s32.totalorder %s663, 0
          %s665 = scalar_select %p664, %s663, 0
          %667 = vsyncadd %s658, 0
          %s668 = smul.addr %s665, 2
          %s669 = sadd.s32 1, %s668
          %s670 = smul.addr %s41, 16
          %s671 = sadd.s32 %s669, %s670
          %s672 = smul.addr %s671, 4
          %s673 = scalar_lea.hbm %s5, %s672
          %s675 = sshll.u32 %s673, 4
          %s676 = int_to_ptr.hbm [resolvable:$true] %s675
          %s677 = sshll.u32 %s661, 4
          %s678 = int_to_ptr.vmem [resolvable:$true] %s677
          %680 = dma.hbm_to_vmem [thread:$0]  %s676, 64, %s678, %s658
        $region68: #{tpu_custom_call.1} parent=43 // pred_fallthru
          _
        // Predicated region
        $region69: #{tpu_custom_call.1} parent=43 // pred_check
          %p681 = pneg %p268
        $region70: #{tpu_custom_call.1} parent=43 // pred_check_branch
          %683 = sbr.rel (%p681) target = $region72
        $region71: #{tpu_custom_call.1} parent=43 // pred_region
          %s684 = sand.u32 %s34, 1
          %s685 = scalar_lea.sflag [#allocation12], %s684
          %s686 = sand.u32 %s258, 1
          %s687 = smul.addr %s686, 4
          %s688 = scalar_lea.vmem [#allocation13], %s687
          %s689 = sadd.s32 %s42, 1
          %s690 = smul.u32 %s689, 4
          %p691 = scmp.lt.s32.totalorder %s690, 7
          %s692 = scalar_select %p691, %s690, 7
          %694 = vsyncadd %s685, 0
          %s695 = smul.addr %s692, 2
          %s696 = smul.addr %s41, 16
          %s697 = sadd.s32 %s695, %s696
          %s698 = smul.addr %s697, 4
          %s699 = scalar_lea.hbm %s6, %s698
          %s701 = sshll.u32 %s699, 4
          %s702 = int_to_ptr.hbm [resolvable:$true] %s701
          %s703 = sshll.u32 %s688, 4
          %s704 = int_to_ptr.vmem [resolvable:$true] %s703
          %706 = dma.hbm_to_vmem [thread:$0]  %s702, 64, %s704, %s685
        $region72: #{tpu_custom_call.1} parent=43 // pred_fallthru
          _
      $region44: #{tpu_custom_call.1} parent=5 // pred_fallthru
        _
      %p707 = scmp.le.s32.totalorder 1, %s34
      %p708 = scmp.lt.s32.totalorder %s34, 5
      %p709 = pnand %p707, %p708
      %p710 = pneg %p709
      // Predicated region
      $region73: #{tpu_custom_call.1} parent=5 // pred_check
        _
      $region74: #{tpu_custom_call.1} parent=5 // pred_check_branch
        %712 = sbr.rel (%p709) target = $region76
      $region75: #{tpu_custom_call.1} parent=5 // pred_region
        %s713 = ssub.s32 %s34, 1
        %s714 = sand.u32 %s61, 1
        %s715 = scalar_lea.sflag [#allocation4], %s714
        %s716 = sand.u32 %s61, 1
        %s717 = smul.addr %s716, 32
        %s718 = scalar_lea.vmem [#allocation3], %s717
        // Predicated region
        $region77: #{tpu_custom_call.1} parent=75 // pred_check
          %p719 = pneg %p74
        $region78: #{tpu_custom_call.1} parent=75 // pred_check_branch
          %721 = sbr.rel (%p719) target = $region80
        $region79: #{tpu_custom_call.1} parent=75 // pred_region
          %723 = dma.done %s715, 512
        $region80: #{tpu_custom_call.1} parent=75 // pred_fallthru
          _
        %s724 = sand.u32 %s39, 1
        %s725 = scalar_lea.sflag [#allocation6], %s724
        %s726 = sand.u32 %s97, 1
        %s727 = smul.addr %s726, 8
        %s728 = scalar_lea.vmem [#allocation5], %s727
        // Predicated region
        $region81: #{tpu_custom_call.1} parent=75 // pred_check
          %p729 = pneg %p110
        $region82: #{tpu_custom_call.1} parent=75 // pred_check_branch
          %731 = sbr.rel (%p729) target = $region84
        $region83: #{tpu_custom_call.1} parent=75 // pred_region
          %733 = dma.done %s725, 128
        $region84: #{tpu_custom_call.1} parent=75 // pred_fallthru
          _
        %s734 = sand.u32 %s39, 1
        %s735 = scalar_lea.sflag [#allocation6], %s734
        %s736 = sand.u32 %s133, 1
        %s737 = smul.addr %s736, 8
        %s738 = scalar_lea.vmem [#allocation7], %s737
        // Predicated region
        $region85: #{tpu_custom_call.1} parent=75 // pred_check
          %p739 = pneg %p146
        $region86: #{tpu_custom_call.1} parent=75 // pred_check_branch
          %741 = sbr.rel (%p739) target = $region88
        $region87: #{tpu_custom_call.1} parent=75 // pred_region
          %743 = dma.done %s735, 128
        $region88: #{tpu_custom_call.1} parent=75 // pred_fallthru
          _
        %s744 = sand.u32 %s39, 1
        %s745 = scalar_lea.sflag [#allocation9], %s744
        %s746 = sand.u32 %s161, 1
        %s747 = smul.addr %s746, 16
        %s748 = scalar_lea.vmem [#allocation8], %s747
        // Predicated region
        $region89: #{tpu_custom_call.1} parent=75 // pred_check
          %p749 = pneg %p174
        $region90: #{tpu_custom_call.1} parent=75 // pred_check_branch
          %751 = sbr.rel (%p749) target = $region92
        $region91: #{tpu_custom_call.1} parent=75 // pred_region
          %753 = dma.done %s745, 256
        $region92: #{tpu_custom_call.1} parent=75 // pred_fallthru
          _
        %s754 = sand.u32 %s39, 1
        %s755 = scalar_lea.sflag [#allocation9], %s754
        %s756 = sand.u32 %s189, 1
        %s757 = smul.addr %s756, 16
        %s758 = scalar_lea.vmem [#allocation10], %s757
        // Predicated region
        $region93: #{tpu_custom_call.1} parent=75 // pred_check
          %p759 = pneg %p202
        $region94: #{tpu_custom_call.1} parent=75 // pred_check_branch
          %761 = sbr.rel (%p759) target = $region96
        $region95: #{tpu_custom_call.1} parent=75 // pred_region
          %763 = dma.done %s755, 256
        $region96: #{tpu_custom_call.1} parent=75 // pred_fallthru
          _
        %s764 = sand.u32 %s39, 1
        %s765 = scalar_lea.sflag [#allocation12], %s764
        %s766 = sand.u32 %s225, 1
        %s767 = smul.addr %s766, 4
        %s768 = scalar_lea.vmem [#allocation11], %s767
        // Predicated region
        $region97: #{tpu_custom_call.1} parent=75 // pred_check
          %p769 = pneg %p238
        $region98: #{tpu_custom_call.1} parent=75 // pred_check_branch
          %771 = sbr.rel (%p769) target = $region100
        $region99: #{tpu_custom_call.1} parent=75 // pred_region
          %773 = dma.done %s765, 64
        $region100: #{tpu_custom_call.1} parent=75 // pred_fallthru
          _
        %s774 = sand.u32 %s39, 1
        %s775 = scalar_lea.sflag [#allocation12], %s774
        %s776 = sand.u32 %s261, 1
        %s777 = smul.addr %s776, 4
        %s778 = scalar_lea.vmem [#allocation13], %s777
        // Predicated region
        $region101: #{tpu_custom_call.1} parent=75 // pred_check
          %p779 = pneg %p274
        $region102: #{tpu_custom_call.1} parent=75 // pred_check_branch
          %781 = sbr.rel (%p779) target = $region104
        $region103: #{tpu_custom_call.1} parent=75 // pred_region
          %783 = dma.done %s775, 64
        $region104: #{tpu_custom_call.1} parent=75 // pred_fallthru
          _
        // Predicated region
        $region105: #{tpu_custom_call.1} parent=75 // pred_check
          %p784 = pneg %p316
        $region106: #{tpu_custom_call.1} parent=75 // pred_check_branch
          %786 = sbr.rel (%p784) target = $region108
        $region107: #{tpu_custom_call.1} parent=75 // pred_region
          %788 = dma.done [#allocation15], 64
        $region108: #{tpu_custom_call.1} parent=75 // pred_fallthru
          _
        // Predicated region
        $region109: #{tpu_custom_call.1} parent=75 // pred_check
          %p789 = pneg %p337
        $region110: #{tpu_custom_call.1} parent=75 // pred_check_branch
          %791 = sbr.rel (%p789) target = $region112
        $region111: #{tpu_custom_call.1} parent=75 // pred_region
          %793 = dma.done [#allocation15], 16
        $region112: #{tpu_custom_call.1} parent=75 // pred_fallthru
          _
        // Predicated region
        $region113: #{tpu_custom_call.1} parent=75 // pred_check
          %p794 = pneg %p358
        $region114: #{tpu_custom_call.1} parent=75 // pred_check_branch
          %796 = sbr.rel (%p794) target = $region116
        $region115: #{tpu_custom_call.1} parent=75 // pred_region
          %798 = dma.done [#allocation18], 192
        $region116: #{tpu_custom_call.1} parent=75 // pred_fallthru
          _
        // Predicated region
        $region117: #{tpu_custom_call.1} parent=75 // pred_check
          %p799 = pneg %p400
        $region118: #{tpu_custom_call.1} parent=75 // pred_check_branch
          %801 = sbr.rel (%p799) target = $region120
        $region119: #{tpu_custom_call.1} parent=75 // pred_region
          %803 = dma.done [#allocation18], 96
        $region120: #{tpu_custom_call.1} parent=75 // pred_fallthru
          _
        %s804 = sand.u32 %s61, 1
        %s805 = scalar_lea.sflag [#allocation4], %s804
        %s806 = sand.u32 %s61, 1
        %s807 = smul.addr %s806, 32
        %s808 = scalar_lea.vmem [#allocation3], %s807
        %p809 = pneg %p74
        %p810 = pneg %p71
        %s811 = sand.u32 %s39, 1
        %s812 = scalar_lea.sflag [#allocation6], %s811
        %s813 = sand.u32 %s97, 1
        %s814 = smul.addr %s813, 8
        %s815 = scalar_lea.vmem [#allocation5], %s814
        %p816 = pneg %p110
        %p817 = pneg %p107
        %s818 = sand.u32 %s39, 1
        %s819 = scalar_lea.sflag [#allocation6], %s818
        %s820 = sand.u32 %s133, 1
        %s821 = smul.addr %s820, 8
        %s822 = scalar_lea.vmem [#allocation7], %s821
        %p823 = pneg %p146
        %p824 = pneg %p143
        %s825 = sand.u32 %s39, 1
        %s826 = scalar_lea.sflag [#allocation9], %s825
        %s827 = sand.u32 %s161, 1
        %s828 = smul.addr %s827, 16
        %s829 = scalar_lea.vmem [#allocation8], %s828
        %p830 = pneg %p174
        %p831 = pneg %p171
        %s832 = sand.u32 %s39, 1
        %s833 = scalar_lea.sflag [#allocation9], %s832
        %s834 = sand.u32 %s189, 1
        %s835 = smul.addr %s834, 16
        %s836 = scalar_lea.vmem [#allocation10], %s835
        %p837 = pneg %p202
        %p838 = pneg %p199
        %s839 = sand.u32 %s39, 1
        %s840 = scalar_lea.sflag [#allocation12], %s839
        %s841 = sand.u32 %s225, 1
        %s842 = smul.addr %s841, 4
        %s843 = scalar_lea.vmem [#allocation11], %s842
        %p844 = pneg %p238
        %p845 = pneg %p235
        %s846 = sand.u32 %s39, 1
        %s847 = scalar_lea.sflag [#allocation12], %s846
        %s848 = sand.u32 %s261, 1
        %s849 = smul.addr %s848, 4
        %s850 = scalar_lea.vmem [#allocation13], %s849
        %p851 = pneg %p274
        %p852 = pneg %p271
        %p853 = pneg %p295
        %p854 = pneg %p292
        %p855 = pneg %p316
        %p856 = pneg %p313
        %p857 = pneg %p337
        %p858 = pneg %p334
        %p859 = pneg %p358
        %p860 = pneg %p355
        %p861 = pneg %p379
        %p862 = pneg %p376
        %p863 = pneg %p400
        %p864 = pneg %p397
        %p865 = pneg %p421
        %p866 = pneg %p418
        %p867 = pneg %p449
        %p868 = pneg %p446
        %s869 = smul.u32 8, %s44
        %p870 = scmp.lt.s32.totalorder %s43, 1
        %s871 = scalar_select %p870, %s43, 1
        %p872 = scmp.lt.s32.totalorder %s869, 15
        %s873 = scalar_select %p872, %s869, 15
        %s874 = smul.addr %s871, 16
        %s875 = sadd.s32 %s873, %s874
        %s876 = smul.addr %s875, 8
        %s877 = scalar_lea.vmem %s14, %s876
        %s878 = smul.u32 4, %s44
        %s879 = smul.u32 %s44, 4
        %s880 = ssub.s32 %s879, 1
        %p881 = scmp.gt.s32.totalorder %s880, 0
        %s882 = scalar_select %p881, %s880, 0
        %s883 = sadd.s32 %s44, 1
        %s884 = smul.u32 %s883, 4
        %p885 = scmp.lt.s32.totalorder %s884, 7
        %s886 = scalar_select %p885, %s884, 7
        %s887 = smul.u32 4, %s44
        %s888 = smul.u32 4, %s44
        %s889 = smul.u32 %s44, 4
        %s890 = ssub.s32 %s889, 1
        %p891 = scmp.gt.s32.totalorder %s890, 0
        %s892 = scalar_select %p891, %s890, 0
        %s893 = sadd.s32 %s44, 1
        %s894 = smul.u32 %s893, 4
        %p895 = scmp.lt.s32.totalorder %s894, 7
        %s896 = scalar_select %p895, %s894, 7
        %s897 = smul.u32 8, %s44
        %p898 = scmp.lt.s32.totalorder %s43, 1
        %s899 = scalar_select %p898, %s43, 1
        %p900 = scmp.lt.s32.totalorder %s897, 15
        %s901 = scalar_select %p900, %s897, 15
        %s902 = smul.addr %s899, 16
        %s903 = sadd.s32 %s901, %s902
        %s904 = smul.addr %s903, 8
        %s905 = scalar_lea.vmem %s14, %s904
        %s906 = smul.u32 8, %s44
        %vm908 = vcmask 57344
        %vm909 = vsmask.f32 256
        %vm910 = vmand %vm908, %vm909
        %v911 = vld [vmem:[#allocation2] sm:$0x1]
        %v912 = vsel %vm910, 0, %v911
        %913 = vst [vmem:[#allocation2] sm:$0x1] %v912
        %v914 = vld [vmem:[#allocation2 + $0x8] sm:$0x1]
        %v915 = vsel %vm910, 0, %v914
        %916 = vst [vmem:[#allocation2 + $0x8] sm:$0x1] %v915
        %v917 = vld [vmem:[#allocation2 + $0x10] sm:$0x1]
        %v918 = vsel %vm910, 0, %v917
        %919 = vst [vmem:[#allocation2 + $0x10] sm:$0x1] %v918
        %v920 = vld [vmem:[#allocation2 + $0x18] sm:$0x1]
        %v921 = vsel %vm910, 0, %v920
        %922 = vst [vmem:[#allocation2 + $0x18] sm:$0x1] %v921
        %v923 = vld [vmem:[#allocation2 + $0x20] sm:$0x1]
        %v924 = vsel %vm910, 0, %v923
        %925 = vst [vmem:[#allocation2 + $0x20] sm:$0x1] %v924
        %v926 = vld [vmem:[#allocation2 + $0x28] sm:$0x1]
        %v927 = vsel %vm910, 0, %v926
        %928 = vst [vmem:[#allocation2 + $0x28] sm:$0x1] %v927
        %v929 = vld [vmem:[#allocation2 + $0x30] sm:$0x1]
        %v930 = vsel %vm910, 0, %v929
        %931 = vst [vmem:[#allocation2 + $0x30] sm:$0x1] %v930
        %v932 = vld [vmem:[#allocation2 + $0x38] sm:$0x1]
        %v933 = vsel %vm910, 0, %v932
        %934 = vst [vmem:[#allocation2 + $0x38] sm:$0x1] %v933
        %v935 = vld [vmem:[#allocation2 + $0x40] sm:$0x1]
        %v936 = vsel %vm910, 0, %v935
        %937 = vst [vmem:[#allocation2 + $0x40] sm:$0x1] %v936
        %v938 = vld [vmem:[#allocation2 + $0x48] sm:$0x1]
        %v939 = vsel %vm910, 0, %v938
        %940 = vst [vmem:[#allocation2 + $0x48] sm:$0x1] %v939
        %vm941 = vsmask.f32 7938
        %vm942 = vmand %vm908, %vm941
        %v943 = vld [vmem:[#allocation2 + $0x4] sm:$0x1]
        %v944 = vsel %vm942, 0, %v943
        %945 = vst [vmem:[#allocation2 + $0x4] sm:$0x1] %v944
        %v946 = vld [vmem:[#allocation2 + $0xc] sm:$0x1]
        %v947 = vsel %vm942, 0, %v946
        %948 = vst [vmem:[#allocation2 + $0xc] sm:$0x1] %v947
        %v949 = vld [vmem:[#allocation2 + $0x14] sm:$0x1]
        %v950 = vsel %vm942, 0, %v949
        %951 = vst [vmem:[#allocation2 + $0x14] sm:$0x1] %v950
        %v952 = vld [vmem:[#allocation2 + $0x1c] sm:$0x1]
        %v953 = vsel %vm942, 0, %v952
        %954 = vst [vmem:[#allocation2 + $0x1c] sm:$0x1] %v953
        %v955 = vld [vmem:[#allocation2 + $0x24] sm:$0x1]
        %v956 = vsel %vm942, 0, %v955
        %957 = vst [vmem:[#allocation2 + $0x24] sm:$0x1] %v956
        %v958 = vld [vmem:[#allocation2 + $0x2c] sm:$0x1]
        %v959 = vsel %vm942, 0, %v958
        %960 = vst [vmem:[#allocation2 + $0x2c] sm:$0x1] %v959
        %v961 = vld [vmem:[#allocation2 + $0x34] sm:$0x1]
        %v962 = vsel %vm942, 0, %v961
        %963 = vst [vmem:[#allocation2 + $0x34] sm:$0x1] %v962
        %v964 = vld [vmem:[#allocation2 + $0x3c] sm:$0x1]
        %v965 = vsel %vm942, 0, %v964
        %966 = vst [vmem:[#allocation2 + $0x3c] sm:$0x1] %v965
        %v967 = vld [vmem:[#allocation2 + $0x44] sm:$0x1]
        %v968 = vsel %vm942, 0, %v967
        %969 = vst [vmem:[#allocation2 + $0x44] sm:$0x1] %v968
        %v970 = vld [vmem:[#allocation2 + $0x4c] sm:$0x1]
        %v971 = vsel %vm942, 0, %v970
        %972 = vst [vmem:[#allocation2 + $0x4c] sm:$0x1] %v971
        %v973 = vld [vmem:[#allocation16] sm:$0x1]
        %v974 = vld [vmem:[%s718] sm:$0xff]
        %v975 = vld [vmem:[%s718 + $0x8] sm:$0xff]
        %v976 = vld [vmem:[%s718 + $0x10] sm:$0xff]
        %v977 = vld [vmem:[%s718 + $0x18] sm:$0xff]
        %v978 = vpack.c.bf16 %v975, %v974
        %v979 = vpack.c.bf16 %v977, %v976
        %v980 = vld [vmem:[%s7] sm:$0xf]
        %v981 = vld [vmem:[#allocation14] sm:$0xf]
        %v983 = vperm.slane %v973, 0
        %vm985 = vcmask 64512
        %v987 = vsel %vm985, %v978, 0
        %v990 = vsel %vm985, %v979, 0
        %vm992 = vcmask 1043456
        %v994 = vsel %vm992, %v980, 0
        %996 = vmatpush.bf16.msra.mxu0 0
        %997 = vmatpush.bf16.msra.mxu0 0
        %998 = vmatpush.bf16.msra.mxu0 0
        %999 = vmatpush.bf16.msra.mxu0 0
        %1000 = vmatpush.bf16.msra.mxu0 0
        %1001 = vmatpush.bf16.msra.mxu0 0
        %1002 = vmatpush.bf16.msra.mxu0 0
        %1003 = vmatpush.bf16.msra.mxu0 %v994
        %1004 = vmatmul.bf16.gmra.mxu0 %v987
        %v1005 = vpop.f32.mrf.mxu0
        %v1006 = vadd.f32 %v983, %v1005
        %v1007 = vpop.f32.mrf.mxu0
        %v1008 = vadd.f32 %v983, %v1007
        %1009 = vmatmul.bf16.gmra.mxu0 %v990
        %v1010 = vpop.f32.mrf.mxu0
        %v1011 = vadd.f32 %v983, %v1010
        %v1012 = vpop.f32.mrf.mxu0
        %v1013 = vadd.f32 %v983, %v1012
        %1014 = vdwg.mxu0
        %v1015 = vld [vmem:[%s748] sm:$0xf]
        %v1016 = vld [vmem:[%s748 + $0x4] sm:$0xf]
        %v1017 = vld [vmem:[%s748 + $0x8] sm:$0xf]
        %v1018 = vld [vmem:[%s748 + $0xc] sm:$0xf]
        %v1019 = vunpack.c.l.bf16 %v1015
        %v1020 = vunpack.c.l.bf16 %v1016
        %v1021 = vunpack.c.l.bf16 %v1017
        %v1022 = vunpack.c.l.bf16 %v1018
        %v1023 = vadd.f32 %v1006, %v1019
        %v1024 = vadd.f32 %v1008, %v1020
        %v1025 = vadd.f32 %v1011, %v1021
        %v1026 = vadd.f32 %v1013, %v1022
        %v1028 = vsel %vm992, %v981, 0
        %1030 = vmatpush.bf16.msra.mxu0 0
        %1031 = vmatpush.bf16.msra.mxu0 0
        %1032 = vmatpush.bf16.msra.mxu0 0
        %1033 = vmatpush.bf16.msra.mxu0 0
        %1034 = vmatpush.bf16.msra.mxu0 0
        %1035 = vmatpush.bf16.msra.mxu0 0
        %1036 = vmatpush.bf16.msra.mxu0 0
        %1037 = vmatpush.bf16.msra.mxu0 %v1028
        %1038 = vmatmul.bf16.gmra.mxu0 %v987
        %v1039 = vpop.f32.mrf.mxu0
        %v1040 = vadd.f32 %v983, %v1039
        %v1041 = vpop.f32.mrf.mxu0
        %v1042 = vadd.f32 %v983, %v1041
        %1043 = vmatmul.bf16.gmra.mxu0 %v990
        %v1044 = vpop.f32.mrf.mxu0
        %v1045 = vadd.f32 %v983, %v1044
        %v1046 = vpop.f32.mrf.mxu0
        %v1047 = vadd.f32 %v983, %v1046
        %1048 = vdwg.mxu0
        %v1049 = vld [vmem:[%s758] sm:$0xf]
        %v1050 = vld [vmem:[%s758 + $0x4] sm:$0xf]
        %v1051 = vld [vmem:[%s758 + $0x8] sm:$0xf]
        %v1052 = vld [vmem:[%s758 + $0xc] sm:$0xf]
        %v1053 = vunpack.c.l.bf16 %v1049
        %v1054 = vunpack.c.l.bf16 %v1050
        %v1055 = vunpack.c.l.bf16 %v1051
        %v1056 = vunpack.c.l.bf16 %v1052
        %v1057 = vadd.f32 %v1040, %v1053
        %v1058 = vadd.f32 %v1042, %v1054
        %v1059 = vadd.f32 %v1045, %v1055
        %v1060 = vadd.f32 %v1047, %v1056
        %v1061 = vpack.c.bf16 %v1023, %v1023
        %v1062 = vpack.c.bf16 %v1024, %v1024
        %v1063 = vpack.c.bf16 %v1025, %v1025
        %v1064 = vpack.c.bf16 %v1026, %v1026
        %v1066 = vshrl.u32 %v1061, 16
        %v1068 = vrot.slane %v1066, 7
        %v1069 = vshll.u32 %v1061, 16
        %v1071 = vor.u32 %v1068, %v1069
        %v1072 = vrot.slane %v1068, 4
        %v1074 = vshrl.u32 %v1062, 16
        %v1076 = vrot.slane %v1074, 7
        %v1077 = vshll.u32 %v1062, 16
        %v1079 = vor.u32 %v1076, %v1077
        %v1080 = vrot.slane %v1076, 4
        %v1082 = vshrl.u32 %v1063, 16
        %v1084 = vrot.slane %v1082, 7
        %v1085 = vshll.u32 %v1063, 16
        %v1087 = vor.u32 %v1084, %v1085
        %v1088 = vrot.slane %v1084, 4
        %v1090 = vshrl.u32 %v1064, 16
        %v1092 = vrot.slane %v1090, 7
        %v1093 = vshll.u32 %v1064, 16
        %v1095 = vor.u32 %v1092, %v1093
        %v1096 = vrot.slane %v1092, 4
        %s1105 = scalar_lea.vmem [#allocation2], 8
        %vm1106 = vcmask 60416
        %vm1107 = vmand %vm1106, %vm941
        %v1108 = vld [vmem:[%s1105] sm:$0xf]
        %v1109 = vsel %vm1107, %v1071, %v1108
        %1110 = vst [vmem:[%s1105] sm:$0xf] %v1109
        %v1111 = vld [vmem:[%s1105 + $0x4] sm:$0x1]
        %v1112 = vsel %vm910, %v1072, %v1111
        %1113 = vst [vmem:[%s1105 + $0x4] sm:$0x1] %v1112
        %v1114 = vld [vmem:[%s1105 + $0x10] sm:$0xf]
        %v1115 = vsel %vm1107, %v1079, %v1114
        %1116 = vst [vmem:[%s1105 + $0x10] sm:$0xf] %v1115
        %v1117 = vld [vmem:[%s1105 + $0x14] sm:$0x1]
        %v1118 = vsel %vm910, %v1080, %v1117
        %1119 = vst [vmem:[%s1105 + $0x14] sm:$0x1] %v1118
        %v1120 = vld [vmem:[%s1105 + $0x20] sm:$0xf]
        %v1121 = vsel %vm1107, %v1087, %v1120
        %1122 = vst [vmem:[%s1105 + $0x20] sm:$0xf] %v1121
        %v1123 = vld [vmem:[%s1105 + $0x24] sm:$0x1]
        %v1124 = vsel %vm910, %v1088, %v1123
        %1125 = vst [vmem:[%s1105 + $0x24] sm:$0x1] %v1124
        %v1126 = vld [vmem:[%s1105 + $0x30] sm:$0xf]
        %v1127 = vsel %vm1107, %v1095, %v1126
        %1128 = vst [vmem:[%s1105 + $0x30] sm:$0xf] %v1127
        %v1129 = vld [vmem:[%s1105 + $0x34] sm:$0x1]
        %v1130 = vsel %vm910, %v1096, %v1129
        %1131 = vst [vmem:[%s1105 + $0x34] sm:$0x1] %v1130
        %v1132 = vpack.c.bf16 %v1057, %v1057
        %v1133 = vpack.c.bf16 %v1058, %v1058
        %v1134 = vpack.c.bf16 %v1059, %v1059
        %v1135 = vpack.c.bf16 %v1060, %v1060
        %v1137 = vshrl.u32 %v1132, 16
        %v1139 = vrot.slane %v1137, 7
        %v1140 = vshll.u32 %v1132, 16
        %v1142 = vor.u32 %v1139, %v1140
        %v1143 = vrot.slane %v1139, 4
        %v1145 = vshrl.u32 %v1133, 16
        %v1147 = vrot.slane %v1145, 7
        %v1148 = vshll.u32 %v1133, 16
        %v1150 = vor.u32 %v1147, %v1148
        %v1151 = vrot.slane %v1147, 4
        %v1153 = vshrl.u32 %v1134, 16
        %v1155 = vrot.slane %v1153, 7
        %v1156 = vshll.u32 %v1134, 16
        %v1158 = vor.u32 %v1155, %v1156
        %v1159 = vrot.slane %v1155, 4
        %v1161 = vshrl.u32 %v1135, 16
        %v1163 = vrot.slane %v1161, 7
        %v1164 = vshll.u32 %v1135, 16
        %v1166 = vor.u32 %v1163, %v1164
        %v1167 = vrot.slane %v1163, 4
        %s1176 = scalar_lea.vmem [#allocation2], 16
        %v1177 = vld [vmem:[%s1176] sm:$0xf]
        %v1178 = vsel %vm1107, %v1142, %v1177
        %1179 = vst [vmem:[%s1176] sm:$0xf] %v1178
        %v1180 = vld [vmem:[%s1176 + $0x4] sm:$0x1]
        %v1181 = vsel %vm910, %v1143, %v1180
        %1182 = vst [vmem:[%s1176 + $0x4] sm:$0x1] %v1181
        %v1183 = vld [vmem:[%s1176 + $0x10] sm:$0xf]
        %v1184 = vsel %vm1107, %v1150, %v1183
        %1185 = vst [vmem:[%s1176 + $0x10] sm:$0xf] %v1184
        %v1186 = vld [vmem:[%s1176 + $0x14] sm:$0x1]
        %v1187 = vsel %vm910, %v1151, %v1186
        %1188 = vst [vmem:[%s1176 + $0x14] sm:$0x1] %v1187
        %v1189 = vld [vmem:[%s1176 + $0x20] sm:$0xf]
        %v1190 = vsel %vm1107, %v1158, %v1189
        %1191 = vst [vmem:[%s1176 + $0x20] sm:$0xf] %v1190
        %v1192 = vld [vmem:[%s1176 + $0x24] sm:$0x1]
        %v1193 = vsel %vm910, %v1159, %v1192
        %1194 = vst [vmem:[%s1176 + $0x24] sm:$0x1] %v1193
        %v1195 = vld [vmem:[%s1176 + $0x30] sm:$0xf]
        %v1196 = vsel %vm1107, %v1166, %v1195
        %1197 = vst [vmem:[%s1176 + $0x30] sm:$0xf] %v1196
        %v1198 = vld [vmem:[%s1176 + $0x34] sm:$0x1]
        %v1199 = vsel %vm910, %v1167, %v1198
        %1200 = vst [vmem:[%s1176 + $0x34] sm:$0x1] %v1199
        %v1201 = vld [vmem:[%s728] sm:$0xff]
        %v1202 = vpack.c.bf16 %v1201, %v1201
        %v1203 = vld [vmem:[#allocation14] sm:$0xf]
        %v1205 = vsel %vm985, %v1202, 0
        %v1208 = vsel %vm992, %v1203, 0
        %1210 = vmatpush.bf16.msra.mxu0 0
        %1211 = vmatpush.bf16.msra.mxu0 0
        %1212 = vmatpush.bf16.msra.mxu0 0
        %1213 = vmatpush.bf16.msra.mxu0 0
        %1214 = vmatpush.bf16.msra.mxu0 0
        %1215 = vmatpush.bf16.msra.mxu0 0
        %1216 = vmatpush.bf16.msra.mxu0 0
        %1217 = vmatpush.bf16.msra.mxu0 %v1208
        %1218 = vmatmul.bf16.gmra.mxu0 %v1205
        %v1219 = vpop.f32.mrf.mxu0
        %v1220 = vadd.f32 %v983, %v1219
        %v1221 = vpop.f32.mrf.mxu0
        %1222 = vdwg.mxu0
        %v1223 = vld [vmem:[%s768] sm:$0xf]
        %v1224 = vunpack.c.l.bf16 %v1223
        %v1225 = vadd.f32 %v1220, %v1224
        %p1226 = scmp.gt.s32.totalorder %s44, 0
        %s1227 = scalar_select %p1226, 1, 0
        %v1228 = vstv %s1227
        %vm1229 = vcmp.eq.s32.totalorder %v1228, 1
        %v1230 = vsel %vm1229, %v1225, 0.0
        %v1231 = vpack.c.bf16 %v1230, %v1230
        %v1233 = vshrl.u32 %v1231, 16
        %v1235 = vrot.slane %v1233, 7
        %v1236 = vshll.u32 %v1231, 16
        %v1238 = vor.u32 %v1235, %v1236
        %v1239 = vrot.slane %v1235, 4
        %v1242 = vld [vmem:[#allocation2] sm:$0xf]
        %v1243 = vsel %vm1107, %v1238, %v1242
        %1244 = vst [vmem:[#allocation2] sm:$0xf] %v1243
        %v1245 = vld [vmem:[#allocation2 + $0x4] sm:$0x1]
        %v1246 = vsel %vm910, %v1239, %v1245
        %1247 = vst [vmem:[#allocation2 + $0x4] sm:$0x1] %v1246
        %v1248 = vld [vmem:[%s738] sm:$0xff]
        %v1249 = vpack.c.bf16 %v1248, %v1248
        %v1250 = vld [vmem:[%s7] sm:$0xf]
        %v1252 = vsel %vm985, %v1249, 0
        %v1255 = vsel %vm992, %v1250, 0
        %1257 = vmatpush.bf16.msra.mxu0 0
        %1258 = vmatpush.bf16.msra.mxu0 0
        %1259 = vmatpush.bf16.msra.mxu0 0
        %1260 = vmatpush.bf16.msra.mxu0 0
        %1261 = vmatpush.bf16.msra.mxu0 0
        %1262 = vmatpush.bf16.msra.mxu0 0
        %1263 = vmatpush.bf16.msra.mxu0 0
        %1264 = vmatpush.bf16.msra.mxu0 %v1255
        %1265 = vmatmul.bf16.gmra.mxu0 %v1252
        %v1266 = vpop.f32.mrf.mxu0
        %v1267 = vadd.f32 %v983, %v1266
        %v1268 = vpop.f32.mrf.mxu0
        %1269 = vdwg.mxu0
        %v1270 = vld [vmem:[%s778] sm:$0xf]
        %v1271 = vunpack.c.l.bf16 %v1270
        %v1272 = vadd.f32 %v1267, %v1271
        %p1273 = scmp.lt.s32.totalorder %s44, 1
        %s1274 = scalar_select %p1273, 1, 0
        %v1275 = vstv %s1274
        %vm1276 = vcmp.eq.s32.totalorder %v1275, 1
        %v1277 = vsel %vm1276, %v1272, 0.0
        %v1278 = vpack.c.bf16 %v1277, %v1277
        %v1280 = vshrl.u32 %v1278, 16
        %v1282 = vrot.slane %v1280, 7
        %v1283 = vshll.u32 %v1278, 16
        %v1285 = vor.u32 %v1282, %v1283
        %v1286 = vrot.slane %v1282, 4
        %s1289 = scalar_lea.vmem [#allocation2], 72
        %v1290 = vld [vmem:[%s1289] sm:$0xf]
        %v1291 = vsel %vm1107, %v1285, %v1290
        %1292 = vst [vmem:[%s1289] sm:$0xf] %v1291
        %v1293 = vld [vmem:[%s1289 + $0x4] sm:$0x1]
        %v1294 = vsel %vm910, %v1286, %v1293
        %1295 = vst [vmem:[%s1289 + $0x4] sm:$0x1] %v1294
        %v1296 = vld [vmem:[#allocation2] sm:$0xf]
        %v1297 = vld [vmem:[#allocation2 + $0x8] sm:$0xf]
        %v1298 = vld [vmem:[#allocation2 + $0x10] sm:$0xf]
        %v1299 = vld [vmem:[#allocation2 + $0x18] sm:$0xf]
        %v1300 = vld [vmem:[#allocation2 + $0x20] sm:$0xf]
        %v1301 = vld [vmem:[#allocation2 + $0x28] sm:$0xf]
        %v1302 = vld [vmem:[#allocation2 + $0x30] sm:$0xf]
        %v1303 = vld [vmem:[#allocation2 + $0x38] sm:$0xf]
        %v1304 = vld [vmem:[#allocation2 + $0x40] sm:$0xf]
        %v1305 = vld [vmem:[#allocation2 + $0x48] sm:$0xf]
        %v1306 = vld [vmem:[#allocation2 + $0x4] sm:$0x1]
        %v1307 = vld [vmem:[#allocation2 + $0xc] sm:$0x1]
        %v1308 = vld [vmem:[#allocation2 + $0x14] sm:$0x1]
        %v1309 = vld [vmem:[#allocation2 + $0x1c] sm:$0x1]
        %v1310 = vld [vmem:[#allocation2 + $0x24] sm:$0x1]
        %v1311 = vld [vmem:[#allocation2 + $0x2c] sm:$0x1]
        %v1312 = vld [vmem:[#allocation2 + $0x34] sm:$0x1]
        %v1313 = vld [vmem:[#allocation2 + $0x3c] sm:$0x1]
        %v1314 = vld [vmem:[#allocation2 + $0x44] sm:$0x1]
        %v1315 = vld [vmem:[#allocation2 + $0x4c] sm:$0x1]
        %vm1316 = vsmask.f32 3328
        %vm1317 = vsmask.f32 7440
        %vm1318 = vmor %vm1316, %vm1317
        %v1320 = vshrl.u32 %v1296, 16
        %v1322 = vrot.slane %v1320, 4
        %v1323 = vshll.u32 %v1296, 16
        %v1325 = vrot.slane %v1323, 5
        %v1326 = vor.u32 %v1322, %v1325
        %v1327 = vrot.slane %v1326, 4
        %v1329 = vshll.u32 %v1306, 16
        %v1331 = vrot.slane %v1329, 5
        %v1332 = vsel %vm1318, %v1327, %v1331
        %v1334 = vshrl.u32 %v1297, 16
        %v1336 = vrot.slane %v1334, 4
        %v1337 = vshll.u32 %v1297, 16
        %v1339 = vrot.slane %v1337, 5
        %v1340 = vor.u32 %v1336, %v1339
        %v1341 = vrot.slane %v1340, 4
        %v1343 = vshll.u32 %v1307, 16
        %v1345 = vrot.slane %v1343, 5
        %v1346 = vsel %vm1318, %v1341, %v1345
        %v1348 = vshrl.u32 %v1298, 16
        %v1350 = vrot.slane %v1348, 4
        %v1351 = vshll.u32 %v1298, 16
        %v1353 = vrot.slane %v1351, 5
        %v1354 = vor.u32 %v1350, %v1353
        %v1355 = vrot.slane %v1354, 4
        %v1357 = vshll.u32 %v1308, 16
        %v1359 = vrot.slane %v1357, 5
        %v1360 = vsel %vm1318, %v1355, %v1359
        %v1362 = vshrl.u32 %v1299, 16
        %v1364 = vrot.slane %v1362, 4
        %v1365 = vshll.u32 %v1299, 16
        %v1367 = vrot.slane %v1365, 5
        %v1368 = vor.u32 %v1364, %v1367
        %v1369 = vrot.slane %v1368, 4
        %v1371 = vshll.u32 %v1309, 16
        %v1373 = vrot.slane %v1371, 5
        %v1374 = vsel %vm1318, %v1369, %v1373
        %v1376 = vshrl.u32 %v1300, 16
        %v1378 = vrot.slane %v1376, 4
        %v1379 = vshll.u32 %v1300, 16
        %v1381 = vrot.slane %v1379, 5
        %v1382 = vor.u32 %v1378, %v1381
        %v1383 = vrot.slane %v1382, 4
        %v1385 = vshll.u32 %v1310, 16
        %v1387 = vrot.slane %v1385, 5
        %v1388 = vsel %vm1318, %v1383, %v1387
        %v1390 = vshrl.u32 %v1301, 16
        %v1392 = vrot.slane %v1390, 4
        %v1393 = vshll.u32 %v1301, 16
        %v1395 = vrot.slane %v1393, 5
        %v1396 = vor.u32 %v1392, %v1395
        %v1397 = vrot.slane %v1396, 4
        %v1399 = vshll.u32 %v1311, 16
        %v1401 = vrot.slane %v1399, 5
        %v1402 = vsel %vm1318, %v1397, %v1401
        %v1404 = vshrl.u32 %v1302, 16
        %v1406 = vrot.slane %v1404, 4
        %v1407 = vshll.u32 %v1302, 16
        %v1409 = vrot.slane %v1407, 5
        %v1410 = vor.u32 %v1406, %v1409
        %v1411 = vrot.slane %v1410, 4
        %v1413 = vshll.u32 %v1312, 16
        %v1415 = vrot.slane %v1413, 5
        %v1416 = vsel %vm1318, %v1411, %v1415
        %v1418 = vshrl.u32 %v1303, 16
        %v1420 = vrot.slane %v1418, 4
        %v1421 = vshll.u32 %v1303, 16
        %v1423 = vrot.slane %v1421, 5
        %v1424 = vor.u32 %v1420, %v1423
        %v1425 = vrot.slane %v1424, 4
        %v1427 = vshll.u32 %v1313, 16
        %v1429 = vrot.slane %v1427, 5
        %v1430 = vsel %vm1318, %v1425, %v1429
        %v1432 = vshrl.u32 %v1304, 16
        %v1434 = vrot.slane %v1432, 4
        %v1435 = vshll.u32 %v1304, 16
        %v1437 = vrot.slane %v1435, 5
        %v1438 = vor.u32 %v1434, %v1437
        %v1439 = vrot.slane %v1438, 4
        %v1441 = vshll.u32 %v1314, 16
        %v1443 = vrot.slane %v1441, 5
        %v1444 = vsel %vm1318, %v1439, %v1443
        %v1446 = vshrl.u32 %v1305, 16
        %v1448 = vrot.slane %v1446, 4
        %v1449 = vshll.u32 %v1305, 16
        %v1451 = vrot.slane %v1449, 5
        %v1452 = vor.u32 %v1448, %v1451
        %v1453 = vrot.slane %v1452, 4
        %v1455 = vshll.u32 %v1315, 16
        %v1457 = vrot.slane %v1455, 5
        %v1458 = vsel %vm1318, %v1453, %v1457
        %v1459 = vld [vmem:[#allocation2] sm:$0xe]
        %v1460 = vld [vmem:[#allocation2 + $0x8] sm:$0xe]
        %v1461 = vld [vmem:[#allocation2 + $0x10] sm:$0xe]
        %v1462 = vld [vmem:[#allocation2 + $0x18] sm:$0xe]
        %v1463 = vld [vmem:[#allocation2 + $0x20] sm:$0xe]
        %v1464 = vld [vmem:[#allocation2 + $0x28] sm:$0xe]
        %v1465 = vld [vmem:[#allocation2 + $0x30] sm:$0xe]
        %v1466 = vld [vmem:[#allocation2 + $0x38] sm:$0xe]
        %v1467 = vld [vmem:[#allocation2 + $0x40] sm:$0xe]
        %v1468 = vld [vmem:[#allocation2 + $0x48] sm:$0xe]
        %vm1489 = vcmask 1042432
        %vm1490 = vcmask 1046532
        %vm1491 = vmor %vm1489, %vm1490
        %v1492 = vrot.slane %v1459, 5
        %v1493 = vrot.slane %v1492, 4
        %v1494 = vrot.slane %v1306, 5
        %v1495 = vsel %vm1491, %v1493, %v1494
        %v1496 = vrot.slane %v1460, 5
        %v1497 = vrot.slane %v1496, 4
        %v1498 = vrot.slane %v1307, 5
        %v1499 = vsel %vm1491, %v1497, %v1498
        %v1500 = vrot.slane %v1461, 5
        %v1501 = vrot.slane %v1500, 4
        %v1502 = vrot.slane %v1308, 5
        %v1503 = vsel %vm1491, %v1501, %v1502
        %v1504 = vrot.slane %v1462, 5
        %v1505 = vrot.slane %v1504, 4
        %v1506 = vrot.slane %v1309, 5
        %v1507 = vsel %vm1491, %v1505, %v1506
        %v1508 = vrot.slane %v1463, 5
        %v1509 = vrot.slane %v1508, 4
        %v1510 = vrot.slane %v1310, 5
        %v1511 = vsel %vm1491, %v1509, %v1510
        %v1512 = vrot.slane %v1464, 5
        %v1513 = vrot.slane %v1512, 4
        %v1514 = vrot.slane %v1311, 5
        %v1515 = vsel %vm1491, %v1513, %v1514
        %v1516 = vrot.slane %v1465, 5
        %v1517 = vrot.slane %v1516, 4
        %v1518 = vrot.slane %v1312, 5
        %v1519 = vsel %vm1491, %v1517, %v1518
        %v1520 = vrot.slane %v1466, 5
        %v1521 = vrot.slane %v1520, 4
        %v1522 = vrot.slane %v1313, 5
        %v1523 = vsel %vm1491, %v1521, %v1522
        %v1524 = vrot.slane %v1467, 5
        %v1525 = vrot.slane %v1524, 4
        %v1526 = vrot.slane %v1314, 5
        %v1527 = vsel %vm1491, %v1525, %v1526
        %v1528 = vrot.slane %v1468, 5
        %v1529 = vrot.slane %v1528, 4
        %v1530 = vrot.slane %v1315, 5
        %v1531 = vsel %vm1491, %v1529, %v1530
        %v1532 = vld [vmem:[#allocation17] sm:$0xf]
        %v1533 = vld [vmem:[%s11] sm:$0x3]
        %v1534 = vld [vmem:[#allocation19] sm:$0x3]
        %s1535 = scalar_lea.vmem [#allocation17], 4
        %v1536 = vld [vmem:[%s1535] sm:$0xf]
        %v1537 = vunpack.c.l.b16 %v1346
        %v1538 = vunpack.c.l.b16 %v1360
        %v1539 = vunpack.c.l.b16 %v1374
        %v1540 = vunpack.c.l.b16 %v1388
        %v1541 = vunpack.c.l.b16 %v1402
        %v1542 = vunpack.c.l.b16 %v1416
        %v1543 = vunpack.c.l.b16 %v1430
        %v1544 = vunpack.c.l.b16 %v1444
        %v1545 = vpack.c.b16 %v1538, %v1537
        %v1546 = vpack.c.b16 %v1540, %v1539
        %v1547 = vpack.c.b16 %v1542, %v1541
        %v1548 = vpack.c.b16 %v1544, %v1543
        %v1550 = vsel %vm985, %v1545, 0
        %v1553 = vsel %vm985, %v1546, 0
        %v1556 = vsel %vm985, %v1547, 0
        %v1559 = vsel %vm985, %v1548, 0
        %v1562 = vsel %vm992, %v1536, 0
        %1564 = vmatpush.bf16.msra.mxu0 0
        %1565 = vmatpush.bf16.msra.mxu0 0
        %1566 = vmatpush.bf16.msra.mxu0 0
        %1567 = vmatpush.bf16.msra.mxu0 0
        %1568 = vmatpush.bf16.msra.mxu0 0
        %1569 = vmatpush.bf16.msra.mxu0 0
        %1570 = vmatpush.bf16.msra.mxu0 0
        %1571 = vmatpush.bf16.msra.mxu0 %v1562
        %1572 = vmatmul.bf16.gmra.mxu0 %v1550
        %v1573 = vpop.f32.mrf.mxu0
        %v1574 = vadd.f32 0.0, %v1573
        %v1575 = vpop.f32.mrf.mxu0
        %v1576 = vadd.f32 0.0, %v1575
        %1577 = vmatmul.bf16.gmra.mxu0 %v1553
        %v1578 = vpop.f32.mrf.mxu0
        %v1579 = vadd.f32 0.0, %v1578
        %v1580 = vpop.f32.mrf.mxu0
        %v1581 = vadd.f32 0.0, %v1580
        %1582 = vmatmul.bf16.gmra.mxu0 %v1556
        %v1583 = vpop.f32.mrf.mxu0
        %v1584 = vadd.f32 0.0, %v1583
        %v1585 = vpop.f32.mrf.mxu0
        %v1586 = vadd.f32 0.0, %v1585
        %1587 = vmatmul.bf16.gmra.mxu0 %v1559
        %v1588 = vpop.f32.mrf.mxu0
        %v1589 = vadd.f32 0.0, %v1588
        %v1590 = vpop.f32.mrf.mxu0
        %v1591 = vadd.f32 0.0, %v1590
        %1592 = vdwg.mxu0
        %v1593 = vunpack.c.l.b16 %v1332
        %v1594 = vpack.c.b16 %v1537, %v1593
        %v1595 = vpack.c.b16 %v1539, %v1538
        %v1596 = vpack.c.b16 %v1541, %v1540
        %v1597 = vpack.c.b16 %v1543, %v1542
        %v1599 = vsel %vm985, %v1594, 0
        %v1602 = vsel %vm985, %v1595, 0
        %v1605 = vsel %vm985, %v1596, 0
        %v1608 = vsel %vm985, %v1597, 0
        %v1611 = vsel %vm992, %v1532, 0
        %1613 = vmatpush.bf16.msra.mxu0 0
        %1614 = vmatpush.bf16.msra.mxu0 0
        %1615 = vmatpush.bf16.msra.mxu0 0
        %1616 = vmatpush.bf16.msra.mxu0 0
        %1617 = vmatpush.bf16.msra.mxu0 0
        %1618 = vmatpush.bf16.msra.mxu0 0
        %1619 = vmatpush.bf16.msra.mxu0 0
        %1620 = vmatpush.bf16.msra.mxu0 %v1611
        %1621 = vmatmul.bf16.gmra.mxu0 %v1599
        %v1622 = vpop.f32.mrf.mxu0
        %v1623 = vadd.f32 %v1574, %v1622
        %v1624 = vpop.f32.mrf.mxu0
        %v1625 = vadd.f32 %v1576, %v1624
        %1626 = vmatmul.bf16.gmra.mxu0 %v1602
        %v1627 = vpop.f32.mrf.mxu0
        %v1628 = vadd.f32 %v1579, %v1627
        %v1629 = vpop.f32.mrf.mxu0
        %v1630 = vadd.f32 %v1581, %v1629
        %1631 = vmatmul.bf16.gmra.mxu0 %v1605
        %v1632 = vpop.f32.mrf.mxu0
        %v1633 = vadd.f32 %v1584, %v1632
        %v1634 = vpop.f32.mrf.mxu0
        %v1635 = vadd.f32 %v1586, %v1634
        %1636 = vmatmul.bf16.gmra.mxu0 %v1608
        %v1637 = vpop.f32.mrf.mxu0
        %v1638 = vadd.f32 %v1589, %v1637
        %v1639 = vpop.f32.mrf.mxu0
        %v1640 = vadd.f32 %v1591, %v1639
        %1641 = vdwg.mxu0
        %s1642 = scalar_lea.vmem %s11, 2
        %v1643 = vld [vmem:[%s1642] sm:$0x3]
        %v1652 = vunpack.c.l.b16 %v1297
        %v1653 = vunpack.c.l.b16 %v1298
        %v1654 = vunpack.c.l.b16 %v1299
        %v1655 = vunpack.c.l.b16 %v1300
        %v1656 = vunpack.c.l.b16 %v1301
        %v1657 = vunpack.c.l.b16 %v1302
        %v1658 = vunpack.c.l.b16 %v1303
        %v1659 = vunpack.c.l.b16 %v1304
        %v1660 = vpack.c.b16 %v1653, %v1652
        %v1661 = vpack.c.b16 %v1655, %v1654
        %v1662 = vpack.c.b16 %v1657, %v1656
        %v1663 = vpack.c.b16 %v1659, %v1658
        %1664 = vrot.lane.b32.xlu0 %v1660, 124
        %v1665 = vpop.permute.xlu0 %1664
        %1666 = vrot.lane.b32.xlu0 %v1661, 124
        %v1667 = vpop.permute.xlu0 %1666
        %1668 = vrot.lane.b32.xlu0 %v1662, 124
        %v1669 = vpop.permute.xlu0 %1668
        %1670 = vrot.lane.b32.xlu0 %v1663, 124
        %v1671 = vpop.permute.xlu0 %1670
        %vm1672 = vcmask 31744
        %v1674 = vsel %vm1672, %v1665, 0
        %v1677 = vsel %vm1672, %v1667, 0
        %v1680 = vsel %vm1672, %v1669, 0
        %v1683 = vsel %vm1672, %v1671, 0
        %vm1685 = vcmask 1041408
        %v1687 = vsel %vm1685, %v1643, 0
        %1689 = vmatpush.bf16.msra.mxu0 0
        %1690 = vmatpush.bf16.msra.mxu0 0
        %1691 = vmatpush.bf16.msra.mxu0 0
        %1692 = vmatpush.bf16.msra.mxu0 0
        %1693 = vmatpush.bf16.msra.mxu0 0
        %1694 = vmatpush.bf16.msra.mxu0 0
        %1695 = vmatpush.bf16.msra.mxu0 0
        %1696 = vmatpush.bf16.msra.mxu0 %v1687
        %1697 = vmatmul.bf16.gmra.mxu0 %v1674
        %v1698 = vpop.f32.mrf.mxu0
        %v1699 = vadd.f32 0.0, %v1698
        %v1700 = vpop.f32.mrf.mxu0
        %v1701 = vadd.f32 0.0, %v1700
        %1702 = vmatmul.bf16.gmra.mxu0 %v1677
        %v1703 = vpop.f32.mrf.mxu0
        %v1704 = vadd.f32 0.0, %v1703
        %v1705 = vpop.f32.mrf.mxu0
        %v1706 = vadd.f32 0.0, %v1705
        %1707 = vmatmul.bf16.gmra.mxu0 %v1680
        %v1708 = vpop.f32.mrf.mxu0
        %v1709 = vadd.f32 0.0, %v1708
        %v1710 = vpop.f32.mrf.mxu0
        %v1711 = vadd.f32 0.0, %v1710
        %1712 = vmatmul.bf16.gmra.mxu0 %v1683
        %v1713 = vpop.f32.mrf.mxu0
        %v1714 = vadd.f32 0.0, %v1713
        %v1715 = vpop.f32.mrf.mxu0
        %v1716 = vadd.f32 0.0, %v1715
        %1717 = vdwg.mxu0
        %v1719 = vunpack.c.l.b16 %v1296
        %v1720 = vpack.c.b16 %v1652, %v1719
        %v1721 = vpack.c.b16 %v1654, %v1653
        %v1722 = vpack.c.b16 %v1656, %v1655
        %v1723 = vpack.c.b16 %v1658, %v1657
        %1724 = vrot.lane.b32.xlu0 %v1720, 124
        %v1725 = vpop.permute.xlu0 %1724
        %1726 = vrot.lane.b32.xlu0 %v1721, 124
        %v1727 = vpop.permute.xlu0 %1726
        %1728 = vrot.lane.b32.xlu0 %v1722, 124
        %v1729 = vpop.permute.xlu0 %1728
        %1730 = vrot.lane.b32.xlu0 %v1723, 124
        %v1731 = vpop.permute.xlu0 %1730
        %v1733 = vsel %vm1672, %v1725, 0
        %v1736 = vsel %vm1672, %v1727, 0
        %v1739 = vsel %vm1672, %v1729, 0
        %v1742 = vsel %vm1672, %v1731, 0
        %v1745 = vsel %vm1685, %v1533, 0
        %1747 = vmatpush.bf16.msra.mxu0 0
        %1748 = vmatpush.bf16.msra.mxu0 0
        %1749 = vmatpush.bf16.msra.mxu0 0
        %1750 = vmatpush.bf16.msra.mxu0 0
        %1751 = vmatpush.bf16.msra.mxu0 0
        %1752 = vmatpush.bf16.msra.mxu0 0
        %1753 = vmatpush.bf16.msra.mxu0 0
        %1754 = vmatpush.bf16.msra.mxu0 %v1745
        %1755 = vmatmul.bf16.gmra.mxu0 %v1733
        %v1756 = vpop.f32.mrf.mxu0
        %v1757 = vadd.f32 %v1699, %v1756
        %v1758 = vpop.f32.mrf.mxu0
        %v1759 = vadd.f32 %v1701, %v1758
        %1760 = vmatmul.bf16.gmra.mxu0 %v1736
        %v1761 = vpop.f32.mrf.mxu0
        %v1762 = vadd.f32 %v1704, %v1761
        %v1763 = vpop.f32.mrf.mxu0
        %v1764 = vadd.f32 %v1706, %v1763
        %1765 = vmatmul.bf16.gmra.mxu0 %v1739
        %v1766 = vpop.f32.mrf.mxu0
        %v1767 = vadd.f32 %v1709, %v1766
        %v1768 = vpop.f32.mrf.mxu0
        %v1769 = vadd.f32 %v1711, %v1768
        %1770 = vmatmul.bf16.gmra.mxu0 %v1742
        %v1771 = vpop.f32.mrf.mxu0
        %v1772 = vadd.f32 %v1714, %v1771
        %v1773 = vpop.f32.mrf.mxu0
        %v1774 = vadd.f32 %v1716, %v1773
        %1775 = vdwg.mxu0
        %s1776 = scalar_lea.vmem [#allocation19], 2
        %v1777 = vld [vmem:[%s1776] sm:$0x3]
        %v1778 = vunpack.c.l.b16 %v1499
        %v1779 = vunpack.c.l.b16 %v1503
        %v1780 = vunpack.c.l.b16 %v1507
        %v1781 = vunpack.c.l.b16 %v1511
        %v1782 = vunpack.c.l.b16 %v1515
        %v1783 = vunpack.c.l.b16 %v1519
        %v1784 = vunpack.c.l.b16 %v1523
        %v1785 = vunpack.c.l.b16 %v1527
        %v1786 = vpack.c.b16 %v1779, %v1778
        %v1787 = vpack.c.b16 %v1781, %v1780
        %v1788 = vpack.c.b16 %v1783, %v1782
        %v1789 = vpack.c.b16 %v1785, %v1784
        %v1791 = vsel %vm1672, %v1786, 0
        %v1794 = vsel %vm1672, %v1787, 0
        %v1797 = vsel %vm1672, %v1788, 0
        %v1800 = vsel %vm1672, %v1789, 0
        %v1803 = vsel %vm1685, %v1777, 0
        %1805 = vmatpush.bf16.msra.mxu0 0
        %1806 = vmatpush.bf16.msra.mxu0 0
        %1807 = vmatpush.bf16.msra.mxu0 0
        %1808 = vmatpush.bf16.msra.mxu0 0
        %1809 = vmatpush.bf16.msra.mxu0 0
        %1810 = vmatpush.bf16.msra.mxu0 0
        %1811 = vmatpush.bf16.msra.mxu0 0
        %1812 = vmatpush.bf16.msra.mxu0 %v1803
        %1813 = vmatmul.bf16.gmra.mxu0 %v1791
        %v1814 = vpop.f32.mrf.mxu0
        %v1815 = vadd.f32 0.0, %v1814
        %v1816 = vpop.f32.mrf.mxu0
        %v1817 = vadd.f32 0.0, %v1816
        %1818 = vmatmul.bf16.gmra.mxu0 %v1794
        %v1819 = vpop.f32.mrf.mxu0
        %v1820 = vadd.f32 0.0, %v1819
        %v1821 = vpop.f32.mrf.mxu0
        %v1822 = vadd.f32 0.0, %v1821
        %1823 = vmatmul.bf16.gmra.mxu0 %v1797
        %v1824 = vpop.f32.mrf.mxu0
        %v1825 = vadd.f32 0.0, %v1824
        %v1826 = vpop.f32.mrf.mxu0
        %v1827 = vadd.f32 0.0, %v1826
        %1828 = vmatmul.bf16.gmra.mxu0 %v1800
        %v1829 = vpop.f32.mrf.mxu0
        %v1830 = vadd.f32 0.0, %v1829
        %v1831 = vpop.f32.mrf.mxu0
        %v1832 = vadd.f32 0.0, %v1831
        %1833 = vdwg.mxu0
        %v1834 = vunpack.c.l.b16 %v1495
        %v1835 = vpack.c.b16 %v1778, %v1834
        %v1836 = vpack.c.b16 %v1780, %v1779
        %v1837 = vpack.c.b16 %v1782, %v1781
        %v1838 = vpack.c.b16 %v1784, %v1783
        %v1840 = vsel %vm1672, %v1835, 0
        %v1843 = vsel %vm1672, %v1836, 0
        %v1846 = vsel %vm1672, %v1837, 0
        %v1849 = vsel %vm1672, %v1838, 0
        %v1852 = vsel %vm1685, %v1534, 0
        %1854 = vmatpush.bf16.msra.mxu0 0
        %1855 = vmatpush.bf16.msra.mxu0 0
        %1856 = vmatpush.bf16.msra.mxu0 0
        %1857 = vmatpush.bf16.msra.mxu0 0
        %1858 = vmatpush.bf16.msra.mxu0 0
        %1859 = vmatpush.bf16.msra.mxu0 0
        %1860 = vmatpush.bf16.msra.mxu0 0
        %1861 = vmatpush.bf16.msra.mxu0 %v1852
        %1862 = vmatmul.bf16.gmra.mxu0 %v1840
        %v1863 = vpop.f32.mrf.mxu0
        %v1864 = vadd.f32 %v1815, %v1863
        %v1865 = vpop.f32.mrf.mxu0
        %v1866 = vadd.f32 %v1817, %v1865
        %1867 = vmatmul.bf16.gmra.mxu0 %v1843
        %v1868 = vpop.f32.mrf.mxu0
        %v1869 = vadd.f32 %v1820, %v1868
        %v1870 = vpop.f32.mrf.mxu0
        %v1871 = vadd.f32 %v1822, %v1870
        %1872 = vmatmul.bf16.gmra.mxu0 %v1846
        %v1873 = vpop.f32.mrf.mxu0
        %v1874 = vadd.f32 %v1825, %v1873
        %v1875 = vpop.f32.mrf.mxu0
        %v1876 = vadd.f32 %v1827, %v1875
        %1877 = vmatmul.bf16.gmra.mxu0 %v1849
        %v1878 = vpop.f32.mrf.mxu0
        %v1879 = vadd.f32 %v1830, %v1878
        %v1880 = vpop.f32.mrf.mxu0
        %v1881 = vadd.f32 %v1832, %v1880
        %1882 = vdwg.mxu0
        %s1883 = scalar_lea.vmem [#allocation17], 8
        %v1884 = vld [vmem:[%s1883] sm:$0xf]
        %v1885 = vunpack.c.l.b16 %v1458
        %v1886 = vpack.c.b16 %v1885, %v1544
        %v1888 = vsel %vm985, %v1886, 0
        %v1891 = vsel %vm992, %v1884, 0
        %1893 = vmatpush.bf16.msra.mxu0 0
        %1894 = vmatpush.bf16.msra.mxu0 0
        %1895 = vmatpush.bf16.msra.mxu0 0
        %1896 = vmatpush.bf16.msra.mxu0 0
        %1897 = vmatpush.bf16.msra.mxu0 0
        %1898 = vmatpush.bf16.msra.mxu0 0
        %1899 = vmatpush.bf16.msra.mxu0 0
        %1900 = vmatpush.bf16.msra.mxu0 %v1891
        %1901 = vmatmul.bf16.gmra.mxu0 %v1602
        %v1902 = vpop.f32.mrf.mxu0
        %v1903 = vadd.f32 0.0, %v1902
        %v1904 = vpop.f32.mrf.mxu0
        %v1905 = vadd.f32 0.0, %v1904
        %1906 = vmatmul.bf16.gmra.mxu0 %v1605
        %v1907 = vpop.f32.mrf.mxu0
        %v1908 = vadd.f32 0.0, %v1907
        %v1909 = vpop.f32.mrf.mxu0
        %v1910 = vadd.f32 0.0, %v1909
        %1911 = vmatmul.bf16.gmra.mxu0 %v1608
        %v1912 = vpop.f32.mrf.mxu0
        %v1913 = vadd.f32 0.0, %v1912
        %v1914 = vpop.f32.mrf.mxu0
        %v1915 = vadd.f32 0.0, %v1914
        %1916 = vmatmul.bf16.gmra.mxu0 %v1888
        %v1917 = vpop.f32.mrf.mxu0
        %v1918 = vadd.f32 0.0, %v1917
        %v1919 = vpop.f32.mrf.mxu0
        %v1920 = vadd.f32 0.0, %v1919
        %1921 = vdwg.mxu0
        %v1922 = vadd.f32 %v1623, %v1903
        %v1923 = vadd.f32 %v1625, %v1905
        %v1924 = vadd.f32 %v1628, %v1908
        %v1925 = vadd.f32 %v1630, %v1910
        %v1926 = vadd.f32 %v1633, %v1913
        %v1927 = vadd.f32 %v1635, %v1915
        %v1928 = vadd.f32 %v1638, %v1918
        %v1929 = vadd.f32 %v1640, %v1920
        %s1930 = scalar_lea.vmem %s11, 4
        %v1931 = vld [vmem:[%s1930] sm:$0x3]
        %v1933 = vunpack.c.l.b16 %v1305
        %v1934 = vpack.c.b16 %v1933, %v1659
        %1935 = vrot.lane.b32.xlu0 %v1934, 124
        %v1936 = vpop.permute.xlu0 %1935
        %v1938 = vsel %vm1672, %v1936, 0
        %v1941 = vsel %vm1685, %v1931, 0
        %1943 = vmatpush.bf16.msra.mxu0 0
        %1944 = vmatpush.bf16.msra.mxu0 0
        %1945 = vmatpush.bf16.msra.mxu0 0
        %1946 = vmatpush.bf16.msra.mxu0 0
        %1947 = vmatpush.bf16.msra.mxu0 0
        %1948 = vmatpush.bf16.msra.mxu0 0
        %1949 = vmatpush.bf16.msra.mxu0 0
        %1950 = vmatpush.bf16.msra.mxu0 %v1941
        %1951 = vmatmul.bf16.gmra.mxu0 %v1736
        %v1952 = vpop.f32.mrf.mxu0
        %v1953 = vadd.f32 0.0, %v1952
        %v1954 = vpop.f32.mrf.mxu0
        %v1955 = vadd.f32 0.0, %v1954
        %1956 = vmatmul.bf16.gmra.mxu0 %v1739
        %v1957 = vpop.f32.mrf.mxu0
        %v1958 = vadd.f32 0.0, %v1957
        %v1959 = vpop.f32.mrf.mxu0
        %v1960 = vadd.f32 0.0, %v1959
        %1961 = vmatmul.bf16.gmra.mxu0 %v1742
        %v1962 = vpop.f32.mrf.mxu0
        %v1963 = vadd.f32 0.0, %v1962
        %v1964 = vpop.f32.mrf.mxu0
        %v1965 = vadd.f32 0.0, %v1964
        %1966 = vmatmul.bf16.gmra.mxu0 %v1938
        %v1967 = vpop.f32.mrf.mxu0
        %v1968 = vadd.f32 0.0, %v1967
        %v1969 = vpop.f32.mrf.mxu0
        %v1970 = vadd.f32 0.0, %v1969
        %1971 = vdwg.mxu0
        %v1972 = vadd.f32 %v1757, %v1953
        %v1973 = vadd.f32 %v1759, %v1955
        %v1974 = vadd.f32 %v1762, %v1958
        %v1975 = vadd.f32 %v1764, %v1960
        %v1976 = vadd.f32 %v1767, %v1963
        %v1977 = vadd.f32 %v1769, %v1965
        %v1978 = vadd.f32 %v1772, %v1968
        %v1979 = vadd.f32 %v1774, %v1970
        %s1980 = scalar_lea.vmem [#allocation19], 4
        %v1981 = vld [vmem:[%s1980] sm:$0x3]
        %v1982 = vunpack.c.l.b16 %v1531
        %v1983 = vpack.c.b16 %v1982, %v1785
        %v1985 = vsel %vm1672, %v1983, 0
        %v1988 = vsel %vm1685, %v1981, 0
        %1990 = vmatpush.bf16.msra.mxu0 0
        %1991 = vmatpush.bf16.msra.mxu0 0
        %1992 = vmatpush.bf16.msra.mxu0 0
        %1993 = vmatpush.bf16.msra.mxu0 0
        %1994 = vmatpush.bf16.msra.mxu0 0
        %1995 = vmatpush.bf16.msra.mxu0 0
        %1996 = vmatpush.bf16.msra.mxu0 0
        %1997 = vmatpush.bf16.msra.mxu0 %v1988
        %1998 = vmatmul.bf16.gmra.mxu0 %v1843
        %v1999 = vpop.f32.mrf.mxu0
        %v2000 = vadd.f32 0.0, %v1999
        %v2001 = vpop.f32.mrf.mxu0
        %v2002 = vadd.f32 0.0, %v2001
        %2003 = vmatmul.bf16.gmra.mxu0 %v1846
        %v2004 = vpop.f32.mrf.mxu0
        %v2005 = vadd.f32 0.0, %v2004
        %v2006 = vpop.f32.mrf.mxu0
        %v2007 = vadd.f32 0.0, %v2006
        %2008 = vmatmul.bf16.gmra.mxu0 %v1849
        %v2009 = vpop.f32.mrf.mxu0
        %v2010 = vadd.f32 0.0, %v2009
        %v2011 = vpop.f32.mrf.mxu0
        %v2012 = vadd.f32 0.0, %v2011
        %2013 = vmatmul.bf16.gmra.mxu0 %v1985
        %v2014 = vpop.f32.mrf.mxu0
        %v2015 = vadd.f32 0.0, %v2014
        %v2016 = vpop.f32.mrf.mxu0
        %v2017 = vadd.f32 0.0, %v2016
        %2018 = vdwg.mxu0
        %v2019 = vadd.f32 %v1864, %v2000
        %v2020 = vadd.f32 %v1866, %v2002
        %v2021 = vadd.f32 %v1869, %v2005
        %v2022 = vadd.f32 %v1871, %v2007
        %v2023 = vadd.f32 %v1874, %v2010
        %v2024 = vadd.f32 %v1876, %v2012
        %v2025 = vadd.f32 %v1879, %v2015
        %v2026 = vadd.f32 %v1881, %v2017
        %2035 = vrot.lane.b32.xlu0 %v2019, 4
        %v2036 = vpop.permute.xlu0 %2035
        %2037 = vrot.lane.b32.xlu0 %v2020, 4
        %v2038 = vpop.permute.xlu0 %2037
        %2039 = vrot.lane.b32.xlu0 %v2021, 4
        %v2040 = vpop.permute.xlu0 %2039
        %2041 = vrot.lane.b32.xlu0 %v2022, 4
        %v2042 = vpop.permute.xlu0 %2041
        %2043 = vrot.lane.b32.xlu0 %v2023, 4
        %v2044 = vpop.permute.xlu0 %2043
        %2045 = vrot.lane.b32.xlu0 %v2024, 4
        %v2046 = vpop.permute.xlu0 %2045
        %2047 = vrot.lane.b32.xlu0 %v2025, 4
        %v2048 = vpop.permute.xlu0 %2047
        %2049 = vrot.lane.b32.xlu0 %v2026, 4
        %v2050 = vpop.permute.xlu0 %2049
        %v2059 = vsel %vm1672, %v1972, %v2036
        %v2060 = vsel %vm1672, %v1973, %v2038
        %v2061 = vsel %vm1672, %v1974, %v2040
        %v2062 = vsel %vm1672, %v1975, %v2042
        %v2063 = vsel %vm1672, %v1976, %v2044
        %v2064 = vsel %vm1672, %v1977, %v2046
        %v2065 = vsel %vm1672, %v1978, %v2048
        %v2066 = vsel %vm1672, %v1979, %v2050
        %v2067 = vadd.f32 %v1922, %v2059
        %v2068 = vadd.f32 %v1923, %v2060
        %v2069 = vadd.f32 %v1924, %v2061
        %v2070 = vadd.f32 %v1925, %v2062
        %v2071 = vadd.f32 %v1926, %v2063
        %v2072 = vadd.f32 %v1927, %v2064
        %v2073 = vadd.f32 %v1928, %v2065
        %v2074 = vadd.f32 %v1929, %v2066
        %v2075 = vld [vmem:[%s13] sm:$0x1]
        %v2077 = vperm.slane %v2075, 0
        %v2079 = vadd.f32 %v2067, %v2077
        %v2080 = vadd.f32 %v2068, %v2077
        %v2081 = vadd.f32 %v2069, %v2077
        %v2082 = vadd.f32 %v2070, %v2077
        %v2083 = vadd.f32 %v2071, %v2077
        %v2084 = vadd.f32 %v2072, %v2077
        %v2085 = vadd.f32 %v2073, %v2077
        %v2086 = vadd.f32 %v2074, %v2077
        %v2087 = vmax.f32 %v2079, 0.0
        %v2088 = vmax.f32 %v2080, 0.0
        %v2089 = vmax.f32 %v2081, 0.0
        %v2090 = vmax.f32 %v2082, 0.0
        %v2091 = vmax.f32 %v2083, 0.0
        %v2092 = vmax.f32 %v2084, 0.0
        %v2093 = vmax.f32 %v2085, 0.0
        %v2094 = vmax.f32 %v2086, 0.0
        %2095 = vst.msk [vmem:[%s905] sm:$0xff] %vm985, %v2087
        %2096 = vst.msk [vmem:[%s905 + $0x8] sm:$0xff] %vm985, %v2088
        %2097 = vst.msk [vmem:[%s905 + $0x10] sm:$0xff] %vm985, %v2089
        %2098 = vst.msk [vmem:[%s905 + $0x18] sm:$0xff] %vm985, %v2090
        %2099 = vst.msk [vmem:[%s905 + $0x20] sm:$0xff] %vm985, %v2091
        %2100 = vst.msk [vmem:[%s905 + $0x28] sm:$0xff] %vm985, %v2092
        %2101 = vst.msk [vmem:[%s905 + $0x30] sm:$0xff] %vm985, %v2093
        %2102 = vst.msk [vmem:[%s905 + $0x38] sm:$0xff] %vm985, %v2094
        %s2103 = smul.u32 8, %s44
        %p2104 = scmp.lt.s32.totalorder %s43, 1
        %s2105 = scalar_select %p2104, %s43, 1
        %p2106 = scmp.lt.s32.totalorder %s2103, 15
        %s2107 = scalar_select %p2106, %s2103, 15
        %s2108 = smul.addr %s2105, 16
        %s2109 = sadd.s32 %s2107, %s2108
        %s2110 = smul.addr %s2109, 8
        %s2111 = scalar_lea.vmem %s14, %s2110
        // Predicated region
        $region121: #{tpu_custom_call.1} parent=75 // pred_check
          %p2112 = pneg %p446
        $region122: #{tpu_custom_call.1} parent=75 // pred_check_branch
          %2114 = sbr.rel (%p2112) target = $region124
        $region123: #{tpu_custom_call.1} parent=75 // pred_region
          %s2115 = smul.u32 8, %s44
        $region124: #{tpu_custom_call.1} parent=75 // pred_fallthru
          _
      $region76: #{tpu_custom_call.1} parent=5 // pred_fallthru
        _
      %p2116 = scmp.le.s32.totalorder 2, %s34
      // Predicated region
      $region125: #{tpu_custom_call.1} parent=5 // pred_check
        %p2117 = pneg %p2116
      $region126: #{tpu_custom_call.1} parent=5 // pred_check_branch
        %2119 = sbr.rel (%p2117) target = $region128
      $region127: #{tpu_custom_call.1} parent=5 // pred_region
        %s2120 = ssub.s32 %s34, 2
        // Predicated region
        $region129: #{tpu_custom_call.1} parent=127 // pred_check
          %p2121 = pneg %p452
        $region130: #{tpu_custom_call.1} parent=127 // pred_check_branch
          %2123 = sbr.rel (%p2121) target = $region132
        $region131: #{tpu_custom_call.1} parent=127 // pred_region
          %s2124 = smul.u32 8, %s46
          %p2125 = scmp.lt.s32.totalorder %s45, 1
          %s2126 = scalar_select %p2125, %s45, 1
          %p2127 = scmp.lt.s32.totalorder %s2124, 15
          %s2128 = scalar_select %p2127, %s2124, 15
          %s2129 = smul.addr %s2126, 16
          %s2130 = sadd.s32 %s2128, %s2129
          %s2131 = smul.addr %s2130, 8
          %s2132 = scalar_lea.vmem %s14, %s2131
        $region132: #{tpu_custom_call.1} parent=127 // pred_fallthru
          _
      $region128: #{tpu_custom_call.1} parent=5 // pred_fallthru
        _
    $region6: #{tpu_custom_call.1} parent=1 // loop_footer
      %s38 = sadd.s32 1, %s34
    $region7: #{tpu_custom_call.1} parent=1 // loop_footer_branch
      %33 = sbr.rel target = $region3
    $region8: #{tpu_custom_call.1} parent=1 // loop_exit
      _
    %2133 = vsyncpa [#allocation4], 1
    %s2134 = scalar_lea.sflag [#allocation4], 1
    %2135 = vsyncpa %s2134, 1
    %2136 = vsyncpa [#allocation6], 1
    %s2137 = scalar_lea.sflag [#allocation6], 1
    %2138 = vsyncpa %s2137, 1
    %2139 = vsyncpa [#allocation9], 1
    %s2140 = scalar_lea.sflag [#allocation9], 1
    %2141 = vsyncpa %s2140, 1
    %2142 = vsyncpa [#allocation12], 1
    %s2143 = scalar_lea.sflag [#allocation12], 1
    %2144 = vsyncpa %s2143, 1
    %2145 = vsyncpa [#allocation15], 1
    %2146 = vsyncpa [#allocation18], 1

</llo_original>
